<compile_context>
chip_gen: v6e
topology: v6e:2x2x1
jax: 0.10.0
libtpu: 0.0.40
codegen_flags: <defaults>
</compile_context>

<pallas_src>
import functools

import jax
import jax.numpy as jnp
from jax import lax
from jax.experimental import pallas as pl
from jax.experimental.pallas import tpu as pltpu

FX_ONE = 1 << 10          # 1024
FX_SHIFT = 10
FX_ONE_SQRT = 32          # i_sqrt(1024)
EPS_FX = 1                # fx_from_fp(1/1024)
MOM_FX = 896              # fx_from_fp(7/8)
_FNV = 0x01000193


def fx_from_fp(x):
    return (jnp.asarray(x) * FX_ONE).astype(jnp.int32)


# ----------------------------- in-kernel helpers -----------------------------

def _hash_u32(x):
    """lowbias32 integer hash on uint32 (pure VPU ops, logical shifts)."""
    x = x ^ (x >> jnp.uint32(16))
    x = x * jnp.uint32(0x7FEB352D)
    x = x ^ (x >> jnp.uint32(15))
    x = x * jnp.uint32(0x846CA68B)
    x = x ^ (x >> jnp.uint32(16))
    return x


def _stream_salt(seed_i32, lin_i32, stream):
    """Distinct uint32 salt per (call seed, grid tile, rounding stream)."""
    s = seed_i32.astype(jnp.uint32) * jnp.uint32(0x9E3779B9)
    l = lin_i32.astype(jnp.uint32) * jnp.uint32(0x85EBCA6B)
    k = jnp.uint32((stream * 0xC2B2AE35) & 0xFFFFFFFF)
    return s + l + k


def _rand_u32(shape, salt):
    """Counter-based uniform uint32 bits for a small 2-D shape (epilogue)."""
    r = lax.broadcasted_iota(jnp.int32, shape, 0)
    c = lax.broadcasted_iota(jnp.int32, shape, 1)
    idx = (r * shape[1] + c).astype(jnp.uint32) * jnp.uint32(_FNV)
    return _hash_u32(idx + salt)


def _fx_div_1024(a, h_u32):
    """fx_div(a, 1024): arithmetic shift (floor) + stochastic round (10 bits)."""
    rr = (h_u32 & jnp.uint32(FX_ONE - 1)).astype(jnp.int32)
    return (a >> FX_SHIFT) + (rr < (a & (FX_ONE - 1))).astype(jnp.int32)


def _fx_div_stoch(a, b, h_u32):
    """fx_div(a, b) for positive b (python int or int32 column/array):
    floor((a + r) / b) with r ~ U[0, b), i.e. floor + Bernoulli(mod/b).
    The floor is computed with a two-stage f32 reciprocal refinement and one
    +-1 fixup -> exact for any int32 a with b <= ~2^30 (no vector int div)."""
    b_i = jnp.asarray(b, jnp.int32)
    b_f = b_i.astype(jnp.float32)
    recip = jnp.float32(1.0) / b_f
    # randomized offset r in [0, b) from the top 24 hash bits
    u = (h_u32 >> jnp.uint32(8)).astype(jnp.int32).astype(jnp.float32)
    r = (u * (b_f * jnp.float32(2.0 ** -24))).astype(jnp.int32)
    a2 = a + r
    # stage 1: coarse quotient
    q = jnp.floor(a2.astype(jnp.float32) * recip).astype(jnp.int32)
    rem = a2 - q * b_i
    # stage 2: refine with the (small, exactly representable) remainder
    dq = jnp.floor(rem.astype(jnp.float32) * recip).astype(jnp.int32)
    q = q + dq
    rem = rem - dq * b_i
    # final +-1 fixup (floor boundary)
    return q + (rem >= b_i).astype(jnp.int32) - (rem < 0).astype(jnp.int32)


def _i_sqrt(x):
    """Integer floor sqrt (reference i_sqrt); the internal halving is exact
    because r is always even when halved."""
    r = jnp.zeros_like(x)
    a = 1 << 30
    while a:
        take = (r + a) <= x
        x = jnp.where(take, x - r - a, x)
        r = (r >> 1) + jnp.where(take, jnp.int32(a), jnp.int32(0))
        a //= 4
    return r


# --------------------------------- kernels ---------------------------------

def _bn_stats_kernel(seed_ref, x_ref, mov_ref,
                     mean_ref, std_ref, mm_ref, ms_ref,
                     acc_s_ref, acc_q_ref, *, d_total, nb, n_slab, tc, tm):
    # --- all grid-position math at the top level (never inside pl.when) ---
    n_i = pl.program_id(1)
    m_i = pl.program_id(2)
    first = jnp.logical_and(n_i == 0, m_i == 0)
    last = jnp.logical_and(n_i == pl.num_programs(1) - 1,
                           m_i == pl.num_programs(2) - 1)
    lin = (pl.program_id(0) * pl.num_programs(1) + n_i) * pl.num_programs(2) + m_i
    seed = seed_ref[0]
    salt_sq = _stream_salt(seed, lin, 0)
    salt_ep = [_stream_salt(seed, lin, k) for k in range(1, 6)]

    # per-tile element-index pattern, hoisted once per grid step
    r_io = lax.broadcasted_iota(jnp.int32, (tc, 128), 0)
    c_io = lax.broadcasted_iota(jnp.int32, (tc, 128), 1)
    baseh = (r_io * tm + c_io).astype(jnp.uint32) * jnp.uint32(_FNV)

    @pl.when(first)
    def _():
        acc_s_ref[...] = jnp.zeros_like(acc_s_ref)
        acc_q_ref[...] = jnp.zeros_like(acc_q_ref)

    def body_b(b, carry):
        acc_s, acc_q = carry
        boff = b.astype(jnp.uint32) * jnp.uint32(tc * tm)
        for j in range(n_slab):                       # static 128-lane slabs
            xc = x_ref[b, :, j * 128:(j + 1) * 128]   # (tc, 128) int32
            pre = baseh + (boff + jnp.uint32(j * 128)) * jnp.uint32(_FNV) + salt_sq
            h = _hash_u32(pre)
            rr = (h & jnp.uint32(FX_ONE - 1)).astype(jnp.int32)
            sq = xc * xc                              # wraps like torch int32
            sq = (sq >> FX_SHIFT) + (rr < (sq & (FX_ONE - 1))).astype(jnp.int32)
            acc_s = acc_s + xc
            acc_q = acc_q + sq
        return acc_s, acc_q

    acc_s, acc_q = lax.fori_loop(
        0, nb, body_b, (acc_s_ref[...], acc_q_ref[...]))
    # single accumulator store per grid step
    acc_s_ref[...] = acc_s
    acc_q_ref[...] = acc_q

    @pl.when(last)
    def _():
        s1 = jnp.sum(acc_s, axis=1, keepdims=True)        # (tc, 1) XLU reduce
        s2 = jnp.sum(acc_q, axis=1, keepdims=True)
        mean = _fx_div_stoch(s1, d_total, _rand_u32((tc, 1), salt_ep[0]))
        ex2 = _fx_div_stoch(s2, d_total, _rand_u32((tc, 1), salt_ep[1]))
        msq = _fx_div_1024(mean * mean, _rand_u32((tc, 1), salt_ep[2]))
        var = jnp.maximum(ex2 - msq, 0)
        std = _i_sqrt(var + jnp.int32(EPS_FX)) * jnp.int32(FX_ONE_SQRT)
        mean_ref[...] = mean
        std_ref[...] = std
        mm = mov_ref[:, 0:1]
        ms = mov_ref[:, 1:2]
        one_m = jnp.int32(FX_ONE - MOM_FX)
        mm_ref[...] = _fx_div_1024(jnp.int32(MOM_FX) * mm + one_m * mean,
                                   _rand_u32((tc, 1), salt_ep[3]))
        ms_ref[...] = _fx_div_1024(jnp.int32(MOM_FX) * ms + one_m * std,
                                   _rand_u32((tc, 1), salt_ep[4]))


def _bn_norm_kernel(seed_ref, x_ref, par_ref, y_ref, *, nb, n_slab, tc, tm):
    lin = (pl.program_id(0) * pl.num_programs(1) + pl.program_id(1)) \
        * pl.num_programs(2) + pl.program_id(2)
    salt = _stream_salt(seed_ref[0], lin, 6)

    mean = par_ref[:, 0:1]     # (tc, 1) int32 columns, packed in one DMA
    std = par_ref[:, 1:2]
    gamma = par_ref[:, 2:3]
    beta = par_ref[:, 3:4]

    r_io = lax.broadcasted_iota(jnp.int32, (tc, 128), 0)
    c_io = lax.broadcasted_iota(jnp.int32, (tc, 128), 1)
    baseh = (r_io * tm + c_io).astype(jnp.uint32) * jnp.uint32(_FNV)

    def body_b(b, carry):
        boff = b.astype(jnp.uint32) * jnp.uint32(tc * tm)
        for j in range(n_slab):
            xc = x_ref[b, :, j * 128:(j + 1) * 128]
            pre = baseh + (boff + jnp.uint32(j * 128)) * jnp.uint32(_FNV) + salt
            h = _hash_u32(pre)
            num = (xc - mean) * gamma
            y_ref[b, :, j * 128:(j + 1) * 128] = _fx_div_stoch(num, std, h) + beta
        return carry

    lax.fori_loop(0, nb, body_b, 0)


# -------------------------- tiling / budget helpers --------------------------

def _vmem_limit_bytes():
    """Generation-dependent VMEM budget: ~96 MiB on v5e/v6e (128 MiB phys),
    ~48 MiB on v7x (64 MiB phys) or when the query is unavailable."""
    try:
        cap = int(pltpu.get_tpu_info().vmem_capacity_bytes)
    except Exception:
        cap = 64 * 1024 * 1024
    return max(32 * 1024 * 1024, min(cap * 3 // 4, 96 * 1024 * 1024))


def _pick_tc(C):
    """Channel tile: multiple of 8 dividing C, <= 32, preferring >= 2 blocks
    so both v7x TensorCores get stats work."""
    if C % 8 != 0:
        return C               # small/odd channel counts: one sublane-padded block
    cands = [t for t in range(8, min(C, 32) + 1, 8) if C % t == 0]
    multi = [t for t in cands if C // t >= 2]
    return max(multi) if multi else max(cands)


def _pick_tm(Mp, cap=2048):
    """Largest multiple of 128 dividing Mp, <= cap (Mp is 128-padded)."""
    best = 128
    for t in range(128, min(Mp, cap) + 1, 128):
        if Mp % t == 0:
            best = t
    return best


def _pick_nb(N, per_n_bytes, target_bytes):
    """Largest divisor of N keeping the x block within the byte target."""
    best = 1
    for nb in range(1, N + 1):
        if N % nb == 0 and nb * per_n_bytes <= max(target_bytes, per_n_bytes):
            best = nb
    return best


def _x_spec(nb, tc, tm):
    return pl.BlockSpec((nb, tc, tm), lambda c, n, m, s: (n, c, m))


def _ch_spec(tc, w):
    return pl.BlockSpec((tc, w), lambda c, n, m, s: (c, 0))


# ------------------------------ pallas_call wrappers ------------------------------

def bn_stats(x3, mov, seed, *, d_total, tc, tm, nb, vmem_limit):
    N, C, Mp = x3.shape
    grid = (C // tc, N // nb, Mp // tm)
    kernel = functools.partial(_bn_stats_kernel, d_total=d_total, nb=nb,
                               n_slab=tm // 128, tc=tc, tm=tm)
    ch1 = jax.ShapeDtypeStruct((C, 1), jnp.int32)
    return pl.pallas_call(
        kernel,
        grid_spec=pltpu.PrefetchScalarGridSpec(
            num_scalar_prefetch=1,
            grid=grid,
            in_specs=[_x_spec(nb, tc, tm), _ch_spec(tc, 2)],
            out_specs=(_ch_spec(tc, 1), _ch_spec(tc, 1),
                       _ch_spec(tc, 1), _ch_spec(tc, 1)),
            scratch_shapes=[pltpu.VMEM((tc, 128), jnp.int32),
                            pltpu.VMEM((tc, 128), jnp.int32)]),
        out_shape=(ch1, ch1, ch1, ch1),
        compiler_params=pltpu.CompilerParams(
            dimension_semantics=("parallel", "arbitrary", "arbitrary"),
            vmem_limit_bytes=vmem_limit),
    )(jnp.asarray([seed], jnp.int32), x3, mov)


def bn_normalize(x3, params, seed, *, tc, tm, nb, vmem_limit):
    N, C, Mp = x3.shape
    grid = (C // tc, N // nb, Mp // tm)
    kernel = functools.partial(_bn_norm_kernel, nb=nb, n_slab=tm // 128,
                               tc=tc, tm=tm)
    return pl.pallas_call(
        kernel,
        grid_spec=pltpu.PrefetchScalarGridSpec(
            num_scalar_prefetch=1,
            grid=grid,
            in_specs=[_x_spec(nb, tc, tm), _ch_spec(tc, 4)],
            out_specs=_x_spec(nb, tc, tm)),
        out_shape=jax.ShapeDtypeStruct((N, C, Mp), jnp.int32),
        compiler_params=pltpu.CompilerParams(
            dimension_semantics=("parallel", "parallel", "parallel"),
            vmem_limit_bytes=vmem_limit),
    )(jnp.asarray([seed], jnp.int32), x3, params)


# ------------------------------ module wrapper ------------------------------

class BatchNormNd:
    """Fixed-point BatchNorm over (N, C, *spatial) int32 inputs."""

    def __init__(self, dim, ndim=None):
        self.dim = dim
        self.ndim = ndim
        self.gamma = jnp.full((dim, 1), FX_ONE, dtype=jnp.int32)   # fx_ones(dim, 1)
        self.beta = jnp.zeros((dim, 1), dtype=jnp.int32)           # fx_zeros(dim, 1)
        self.mov_mean = jnp.zeros((dim, 1), dtype=jnp.int32)
        self.mov_std = jnp.full((dim, 1), FX_ONE, dtype=jnp.int32)
        self._seed = 0

    def __call__(self, x, is_t):
        if self.ndim is not None:
            assert x.ndim == self.ndim + 2
        N, C = int(x.shape[0]), int(x.shape[1])
        assert C == self.dim
        M = 1
        for s in x.shape[2:]:
            M *= int(s)
        x3 = x.reshape(N, C, M)                       # contiguous NCHW view
        Mp = -(-M // 128) * 128                       # lane-dense padding
        if Mp != M:
            x3 = jnp.pad(x3, ((0, 0), (0, 0), (0, Mp - M)))   # zeros: sums unaffected

        limit = _vmem_limit_bytes()
        blk_target = limit // 6                       # normalize double-buffers x and y
        tc = _pick_tc(C)
        tm = _pick_tm(Mp)
        nb = _pick_nb(N, tc * tm * 4, blk_target)

        seed = self._seed
        self._seed += 1

        if is_t:
            mov = jnp.concatenate([self.mov_mean, self.mov_std], axis=1)   # (C, 2)
            mean, std, new_mm, new_ms = bn_stats(
                x3, mov, seed, d_total=N * M, tc=tc, tm=tm, nb=nb,
                vmem_limit=limit)
            self.mov_mean, self.mov_std = new_mm, new_ms
            params = jnp.concatenate([mean, std, self.gamma, self.beta], axis=1)
        else:
            params = jnp.concatenate(
                [self.mov_mean, self.mov_std, self.gamma, self.beta], axis=1)

        y3 = bn_normalize(x3, params, seed, tc=tc, tm=tm, nb=nb, vmem_limit=limit)
        if Mp != M:
            y3 = y3[:, :, :M]
        return y3.reshape(x.shape)


# ----------------------------------- main -----------------------------------

if __name__ == "__main__":
    key = jax.random.PRNGKey(0)
    N, C, H, W = 2, 4, 16, 16
    x_fp = jax.random.normal(key, (N, C, H, W), dtype=jnp.float32)
    x = fx_from_fp(x_fp)                     # int32 fixed-point input, NCHW

    bn = BatchNormNd(C, ndim=2)

    # training-mode forward (batch statistics + moving-stat update)
    y_train = jax.block_until_ready(bn(x, True))
    jax.block_until_ready(bn.mov_mean)
    jax.block_until_ready(bn.mov_std)

    # eval-mode forward (uses moving statistics)
    y_eval = jax.block_until_ready(bn(x, False))

    assert y_train.shape == x.shape and y_train.dtype == jnp.int32
    assert y_eval.shape == x.shape and y_eval.dtype == jnp.int32
    assert bn.mov_mean.shape == (C, 1) and bn.mov_std.shape == (C, 1)

    # loose float sanity check of the training-mode normalization
    xt = jnp.swapaxes(x_fp, 0, 1).reshape(C, -1)
    mean = xt.mean(axis=1, keepdims=True)
    std = jnp.sqrt(((xt - mean) ** 2).mean(axis=1, keepdims=True) + 1.0 / 1024.0)
    ref = (xt - mean) / std
    got = jnp.swapaxes(y_train, 0, 1).reshape(C, -1).astype(jnp.float32) / FX_ONE
    err = jnp.abs(got - ref)
    assert float(jnp.max(err)) < 0.25, float(jnp.max(err))
    assert float(jnp.mean(err)) < 0.05, float(jnp.mean(err))

    print("KERNEL_OK")
</pallas_src>

<mosaic_0001>
module attributes {stable_mosaic.version = 11 : i64} {
  func.func @_bn_stats_kernel(%arg0: i32, %arg1: i32, %arg2: i32, %arg3: memref<1xi32, #tpu.memory_space<smem>>, %arg4: memref<2x4x256xi32, #tpu.memory_space<vmem>>, %arg5: memref<4x2xi32, #tpu.memory_space<vmem>>, %arg6: memref<4x1xi32, #tpu.memory_space<vmem>>, %arg7: memref<4x1xi32, #tpu.memory_space<vmem>>, %arg8: memref<4x1xi32, #tpu.memory_space<vmem>>, %arg9: memref<4x1xi32, #tpu.memory_space<vmem>>, %arg10: memref<4x128xi32, #tpu.memory_space<vmem>>, %arg11: memref<4x128xi32, #tpu.memory_space<vmem>>) attributes {dimension_semantics = [#tpu.dimension_semantics<parallel>, #tpu.dimension_semantics<arbitrary>, #tpu.dimension_semantics<arbitrary>], iteration_bounds = array<i64: 1, 1, 1>, scalar_prefetch = 1 : i64, scratch_operands = 2 : i64, tpu.core_type = #tpu.core_type<tc>, window_params = [{transform_indices = @transform_0, window_bounds = array<i64: 2, 4, 256>}, {transform_indices = @transform_1, window_bounds = array<i64: 4, 2>}, {transform_indices = @transform_2, window_bounds = array<i64: 4, 1>}, {transform_indices = @transform_3, window_bounds = array<i64: 4, 1>}, {transform_indices = @transform_4, window_bounds = array<i64: 4, 1>}, {transform_indices = @transform_5, window_bounds = array<i64: 4, 1>}]} {
    %c0_i32 = arith.constant 0 : i32
    %0 = arith.cmpi eq, %arg1, %c0_i32 : i32
    %c0_i32_0 = arith.constant 0 : i32
    %1 = arith.cmpi eq, %arg2, %c0_i32_0 : i32
    %2 = arith.andi %0, %1 : i1
    %c0_i32_1 = arith.constant 0 : i32
    %3 = arith.cmpi eq, %arg1, %c0_i32_1 : i32
    %c0_i32_2 = arith.constant 0 : i32
    %4 = arith.cmpi eq, %arg2, %c0_i32_2 : i32
    %5 = arith.andi %3, %4 : i1
    %c1_i32 = arith.constant 1 : i32
    %6 = arith.muli %arg0, %c1_i32 : i32
    %7 = arith.addi %6, %arg1 : i32
    %c1_i32_3 = arith.constant 1 : i32
    %8 = arith.muli %7, %c1_i32_3 : i32
    %9 = arith.addi %8, %arg2 : i32
    %c0 = arith.constant 0 : index
    %10 = memref.load %arg3[%c0] : memref<1xi32, #tpu.memory_space<smem>>
    %c-1640531527_i32 = arith.constant -1640531527 : i32
    %11 = arith.muli %10, %c-1640531527_i32 : i32
    %c-2048144789_i32 = arith.constant -2048144789 : i32
    %12 = arith.muli %9, %c-2048144789_i32 : i32
    %13 = arith.addi %11, %12 : i32
    %c0_i32_4 = arith.constant 0 : i32
    %14 = arith.addi %13, %c0_i32_4 : i32
    %c-1640531527_i32_5 = arith.constant -1640531527 : i32
    %15 = arith.muli %10, %c-1640531527_i32_5 : i32
    %c-2048144789_i32_6 = arith.constant -2048144789 : i32
    %16 = arith.muli %9, %c-2048144789_i32_6 : i32
    %17 = arith.addi %15, %16 : i32
    %c-1028477387_i32 = arith.constant -1028477387 : i32
    %18 = arith.addi %17, %c-1028477387_i32 : i32
    %c-1640531527_i32_7 = arith.constant -1640531527 : i32
    %19 = arith.muli %10, %c-1640531527_i32_7 : i32
    %c-2048144789_i32_8 = arith.constant -2048144789 : i32
    %20 = arith.muli %9, %c-2048144789_i32_8 : i32
    %21 = arith.addi %19, %20 : i32
    %c-2056954774_i32 = arith.constant -2056954774 : i32
    %22 = arith.addi %21, %c-2056954774_i32 : i32
    %c-1640531527_i32_9 = arith.constant -1640531527 : i32
    %23 = arith.muli %10, %c-1640531527_i32_9 : i32
    %c-2048144789_i32_10 = arith.constant -2048144789 : i32
    %24 = arith.muli %9, %c-2048144789_i32_10 : i32
    %25 = arith.addi %23, %24 : i32
    %c1209535135_i32 = arith.constant 1209535135 : i32
    %26 = arith.addi %25, %c1209535135_i32 : i32
    %c-1640531527_i32_11 = arith.constant -1640531527 : i32
    %27 = arith.muli %10, %c-1640531527_i32_11 : i32
    %c-2048144789_i32_12 = arith.constant -2048144789 : i32
    %28 = arith.muli %9, %c-2048144789_i32_12 : i32
    %29 = arith.addi %27, %28 : i32
    %c181057748_i32 = arith.constant 181057748 : i32
    %30 = arith.addi %29, %c181057748_i32 : i32
    %c-1640531527_i32_13 = arith.constant -1640531527 : i32
    %31 = arith.muli %10, %c-1640531527_i32_13 : i32
    %c-2048144789_i32_14 = arith.constant -2048144789 : i32
    %32 = arith.muli %9, %c-2048144789_i32_14 : i32
    %33 = arith.addi %31, %32 : i32
    %c-847419639_i32 = arith.constant -847419639 : i32
    %34 = arith.addi %33, %c-847419639_i32 : i32
    %35 = tpu.iota {dimensions = array<i32: 0>} : vector<4x128xi32>
    %36 = tpu.iota {dimensions = array<i32: 1>} : vector<4x128xi32>
    %c256_i32 = arith.constant 256 : i32
    %37 = vector.broadcast %c256_i32 : i32 to vector<4x128xi32>
    %38 = arith.muli %35, %37 : vector<4x128xi32>
    %39 = arith.addi %38, %36 : vector<4x128xi32>
    %c16777619_i32 = arith.constant 16777619 : i32
    %40 = vector.broadcast %c16777619_i32 : i32 to vector<4x128xi32>
    %41 = arith.muli %39, %40 : vector<4x128xi32>
    %42 = arith.extui %2 : i1 to i32
    %c0_i32_15 = arith.constant 0 : i32
    %43 = arith.cmpi ne, %42, %c0_i32_15 : i32
    scf.if %43 {
      %c0_i32_28 = arith.constant 0 : i32
      %52 = vector.broadcast %c0_i32_28 : i32 to vector<4x128xi32>
      %c0_29 = arith.constant 0 : index
      %c0_30 = arith.constant 0 : index
      %53 = vector.load %arg10[%c0_29, %c0_30] : memref<4x128xi32, #tpu.memory_space<vmem>>, vector<4x128xi32>
      tpu.vector_store %arg10[%c0_29, %c0_30], %52 {strides = array<i32>} : memref<4x128xi32, #tpu.memory_space<vmem>>, vector<4x128xi32>,
      %c0_i32_31 = arith.constant 0 : i32
      %54 = vector.broadcast %c0_i32_31 : i32 to vector<4x128xi32>
      %c0_32 = arith.constant 0 : index
      %c0_33 = arith.constant 0 : index
      %55 = vector.load %arg11[%c0_32, %c0_33] : memref<4x128xi32, #tpu.memory_space<vmem>>, vector<4x128xi32>
      tpu.vector_store %arg11[%c0_32, %c0_33], %54 {strides = array<i32>} : memref<4x128xi32, #tpu.memory_space<vmem>>, vector<4x128xi32>,
    } else {
    }
    %c0_16 = arith.constant 0 : index
    %c0_17 = arith.constant 0 : index
    %44 = vector.load %arg10[%c0_16, %c0_17] : memref<4x128xi32, #tpu.memory_space<vmem>>, vector<4x128xi32>
    %c0_18 = arith.constant 0 : index
    %c0_19 = arith.constant 0 : index
    %45 = vector.load %arg11[%c0_18, %c0_19] : memref<4x128xi32, #tpu.memory_space<vmem>>, vector<4x128xi32>
    %c0_i32_20 = arith.constant 0 : i32
    %c2_i32 = arith.constant 2 : i32
    %46 = arith.addi %c0_i32_20, %c2_i32 : i32
    %c1_i32_21 = arith.constant 1 : i32
    %47:2 = scf.for %arg12 = %c0_i32_20 to %46 step %c1_i32_21 iter_args(%arg13 = %44, %arg14 = %45) -> (vector<4x128xi32>, vector<4x128xi32>)  : i32 {
      %c1024_i32 = arith.constant 1024 : i32
      %52 = arith.muli %arg12, %c1024_i32 : i32
      %53 = arith.index_cast %arg12 : i32 to index
      %c0_28 = arith.constant 0 : index
      %c0_29 = arith.constant 0 : index
      %54 = vector.load %arg4[%53, %c0_28, %c0_29] : memref<2x4x256xi32, #tpu.memory_space<vmem>>, vector<1x4x128xi32>
      %55 = vector.shape_cast %54 : vector<1x4x128xi32> to vector<4x128xi32>
      %c0_i32_30 = arith.constant 0 : i32
      %56 = arith.addi %52, %c0_i32_30 : i32
      %c16777619_i32_31 = arith.constant 16777619 : i32
      %57 = arith.muli %56, %c16777619_i32_31 : i32
      %58 = vector.broadcast %57 : i32 to vector<4x128xi32>
      %59 = arith.addi %41, %58 : vector<4x128xi32>
      %60 = vector.broadcast %14 : i32 to vector<4x128xi32>
      %61 = arith.addi %59, %60 : vector<4x128xi32>
      %c16_i32 = arith.constant 16 : i32
      %62 = vector.broadcast %c16_i32 : i32 to vector<4x128xi32>
      %63 = arith.shrui %61, %62 : vector<4x128xi32>
      %64 = arith.xori %61, %63 : vector<4x128xi32>
      %c2146121005_i32 = arith.constant 2146121005 : i32
      %65 = vector.broadcast %c2146121005_i32 : i32 to vector<4x128xi32>
      %66 = arith.muli %64, %65 : vector<4x128xi32>
      %c15_i32 = arith.constant 15 : i32
      %67 = vector.broadcast %c15_i32 : i32 to vector<4x128xi32>
      %68 = arith.shrui %66, %67 : vector<4x128xi32>
      %69 = arith.xori %66, %68 : vector<4x128xi32>
      %c-2073254261_i32 = arith.constant -2073254261 : i32
      %70 = vector.broadcast %c-2073254261_i32 : i32 to vector<4x128xi32>
      %71 = arith.muli %69, %70 : vector<4x128xi32>
      %c16_i32_32 = arith.constant 16 : i32
      %72 = vector.broadcast %c16_i32_32 : i32 to vector<4x128xi32>
      %73 = arith.shrui %71, %72 : vector<4x128xi32>
      %74 = arith.xori %71, %73 : vector<4x128xi32>
      %c1023_i32 = arith.constant 1023 : i32
      %75 = vector.broadcast %c1023_i32 : i32 to vector<4x128xi32>
      %76 = arith.andi %74, %75 : vector<4x128xi32>
      %77 = arith.muli %55, %55 : vector<4x128xi32>
      %c10_i32 = arith.constant 10 : i32
      %78 = vector.broadcast %c10_i32 : i32 to vector<4x128xi32>
      %79 = arith.shrsi %77, %78 : vector<4x128xi32>
      %c1023_i32_33 = arith.constant 1023 : i32
      %80 = vector.broadcast %c1023_i32_33 : i32 to vector<4x128xi32>
      %81 = arith.andi %77, %80 : vector<4x128xi32>
      %82 = arith.cmpi slt, %76, %81 : vector<4x128xi32>
      %83 = arith.extui %82 : vector<4x128xi1> to vector<4x128xi32>
      %84 = arith.addi %79, %83 : vector<4x128xi32>
      %85 = arith.addi %arg13, %55 : vector<4x128xi32>
      %86 = arith.addi %arg14, %84 : vector<4x128xi32>
      %87 = arith.index_cast %arg12 : i32 to index
      %c0_34 = arith.constant 0 : index
      %c128 = arith.constant 128 : index
      %88 = vector.load %arg4[%87, %c0_34, %c128] : memref<2x4x256xi32, #tpu.memory_space<vmem>>, vector<1x4x128xi32>
      %89 = vector.shape_cast %88 : vector<1x4x128xi32> to vector<4x128xi32>
      %c128_i32 = arith.constant 128 : i32
      %90 = arith.addi %52, %c128_i32 : i32
      %c16777619_i32_35 = arith.constant 16777619 : i32
      %91 = arith.muli %90, %c16777619_i32_35 : i32
      %92 = vector.broadcast %91 : i32 to vector<4x128xi32>
      %93 = arith.addi %41, %92 : vector<4x128xi32>
      %94 = vector.broadcast %14 : i32 to vector<4x128xi32>
      %95 = arith.addi %93, %94 : vector<4x128xi32>
      %c16_i32_36 = arith.constant 16 : i32
      %96 = vector.broadcast %c16_i32_36 : i32 to vector<4x128xi32>
      %97 = arith.shrui %95, %96 : vector<4x128xi32>
      %98 = arith.xori %95, %97 : vector<4x128xi32>
      %c2146121005_i32_37 = arith.constant 2146121005 : i32
      %99 = vector.broadcast %c2146121005_i32_37 : i32 to vector<4x128xi32>
      %100 = arith.muli %98, %99 : vector<4x128xi32>
      %c15_i32_38 = arith.constant 15 : i32
      %101 = vector.broadcast %c15_i32_38 : i32 to vector<4x128xi32>
      %102 = arith.shrui %100, %101 : vector<4x128xi32>
      %103 = arith.xori %100, %102 : vector<4x128xi32>
      %c-2073254261_i32_39 = arith.constant -2073254261 : i32
      %104 = vector.broadcast %c-2073254261_i32_39 : i32 to vector<4x128xi32>
      %105 = arith.muli %103, %104 : vector<4x128xi32>
      %c16_i32_40 = arith.constant 16 : i32
      %106 = vector.broadcast %c16_i32_40 : i32 to vector<4x128xi32>
      %107 = arith.shrui %105, %106 : vector<4x128xi32>
      %108 = arith.xori %105, %107 : vector<4x128xi32>
      %c1023_i32_41 = arith.constant 1023 : i32
      %109 = vector.broadcast %c1023_i32_41 : i32 to vector<4x128xi32>
      %110 = arith.andi %108, %109 : vector<4x128xi32>
      %111 = arith.muli %89, %89 : vector<4x128xi32>
      %c10_i32_42 = arith.constant 10 : i32
      %112 = vector.broadcast %c10_i32_42 : i32 to vector<4x128xi32>
      %113 = arith.shrsi %111, %112 : vector<4x128xi32>
      %c1023_i32_43 = arith.constant 1023 : i32
      %114 = vector.broadcast %c1023_i32_43 : i32 to vector<4x128xi32>
      %115 = arith.andi %111, %114 : vector<4x128xi32>
      %116 = arith.cmpi slt, %110, %115 : vector<4x128xi32>
      %117 = arith.extui %116 : vector<4x128xi1> to vector<4x128xi32>
      %118 = arith.addi %113, %117 : vector<4x128xi32>
      %119 = arith.addi %85, %89 : vector<4x128xi32>
      %120 = arith.addi %86, %118 : vector<4x128xi32>
      scf.yield %119, %120 : vector<4x128xi32>, vector<4x128xi32>
    }
    %c2_i32_22 = arith.constant 2 : i32
    %c0_23 = arith.constant 0 : index
    %c0_24 = arith.constant 0 : index
    %48 = vector.load %arg10[%c0_23, %c0_24] : memref<4x128xi32, #tpu.memory_space<vmem>>, vector<4x128xi32>
    tpu.vector_store %arg10[%c0_23, %c0_24], %47#0 {strides = array<i32>} : memref<4x128xi32, #tpu.memory_space<vmem>>, vector<4x128xi32>,
    %c0_25 = arith.constant 0 : index
    %c0_26 = arith.constant 0 : index
    %49 = vector.load %arg11[%c0_25, %c0_26] : memref<4x128xi32, #tpu.memory_space<vmem>>, vector<4x128xi32>
    tpu.vector_store %arg11[%c0_25, %c0_26], %47#1 {strides = array<i32>} : memref<4x128xi32, #tpu.memory_space<vmem>>, vector<4x128xi32>,
    %50 = arith.extui %5 : i1 to i32
    %c0_i32_27 = arith.constant 0 : i32
    %51 = arith.cmpi ne, %50, %c0_i32_27 : i32
    scf.if %51 {
      %cst = arith.constant dense<0> : vector<4xi32>
      %52 = vector.multi_reduction <add>, %47#0, %cst [1] : vector<4x128xi32> to vector<4xi32>
      %53 = vector.shape_cast %52 : vector<4xi32> to vector<4x1xi32>
      %cst_28 = arith.constant dense<0> : vector<4xi32>
      %54 = vector.multi_reduction <add>, %47#1, %cst_28 [1] : vector<4x128xi32> to vector<4xi32>
      %55 = vector.shape_cast %54 : vector<4xi32> to vector<4x1xi32>
      %56 = tpu.iota {dimensions = array<i32: 0>} : vector<4x1xi32>
      %57 = tpu.iota {dimensions = array<i32: 1>} : vector<4x1xi32>
      %c1_i32_29 = arith.constant 1 : i32
      %58 = vector.broadcast %c1_i32_29 : i32 to vector<4x1xi32>
      %59 = arith.muli %56, %58 : vector<4x1xi32>
      %60 = arith.addi %59, %57 : vector<4x1xi32>
      %c16777619_i32_30 = arith.constant 16777619 : i32
      %61 = vector.broadcast %c16777619_i32_30 : i32 to vector<4x1xi32>
      %62 = arith.muli %60, %61 : vector<4x1xi32>
      %63 = vector.broadcast %18 : i32 to vector<4x1xi32>
      %64 = arith.addi %62, %63 : vector<4x1xi32>
      %c16_i32 = arith.constant 16 : i32
      %65 = vector.broadcast %c16_i32 : i32 to vector<4x1xi32>
      %66 = arith.shrui %64, %65 : vector<4x1xi32>
      %67 = arith.xori %64, %66 : vector<4x1xi32>
      %c2146121005_i32 = arith.constant 2146121005 : i32
      %68 = vector.broadcast %c2146121005_i32 : i32 to vector<4x1xi32>
      %69 = arith.muli %67, %68 : vector<4x1xi32>
      %c15_i32 = arith.constant 15 : i32
      %70 = vector.broadcast %c15_i32 : i32 to vector<4x1xi32>
      %71 = arith.shrui %69, %70 : vector<4x1xi32>
      %72 = arith.xori %69, %71 : vector<4x1xi32>
      %c-2073254261_i32 = arith.constant -2073254261 : i32
      %73 = vector.broadcast %c-2073254261_i32 : i32 to vector<4x1xi32>
      %74 = arith.muli %72, %73 : vector<4x1xi32>
      %c16_i32_31 = arith.constant 16 : i32
      %75 = vector.broadcast %c16_i32_31 : i32 to vector<4x1xi32>
      %76 = arith.shrui %74, %75 : vector<4x1xi32>
      %77 = arith.xori %74, %76 : vector<4x1xi32>
      %cst_32 = arith.constant 1.000000e+00 : f32
      %cst_33 = arith.constant 5.120000e+02 : f32
      %78 = arith.divf %cst_32, %cst_33 : f32
      %c8_i32 = arith.constant 8 : i32
      %79 = vector.broadcast %c8_i32 : i32 to vector<4x1xi32>
      %80 = arith.shrui %77, %79 : vector<4x1xi32>
      %81 = arith.sitofp %80 : vector<4x1xi32> to vector<4x1xf32>
      %cst_34 = arith.constant 5.120000e+02 : f32
      %cst_35 = arith.constant 5.96046448E-8 : f32
      %82 = arith.mulf %cst_34, %cst_35 : f32
      %83 = vector.broadcast %82 : f32 to vector<4x1xf32>
      %84 = arith.mulf %81, %83 : vector<4x1xf32>
      %85 = arith.fptosi %84 : vector<4x1xf32> to vector<4x1xi32>
      %86 = arith.addi %53, %85 : vector<4x1xi32>
      %87 = arith.sitofp %86 : vector<4x1xi32> to vector<4x1xf32>
      %88 = vector.broadcast %78 : f32 to vector<4x1xf32>
      %89 = arith.mulf %87, %88 : vector<4x1xf32>
      %90 = math.floor %89 : vector<4x1xf32>
      %91 = arith.fptosi %90 : vector<4x1xf32> to vector<4x1xi32>
      %c512_i32 = arith.constant 512 : i32
      %92 = vector.broadcast %c512_i32 : i32 to vector<4x1xi32>
      %93 = arith.muli %91, %92 : vector<4x1xi32>
      %94 = arith.subi %86, %93 : vector<4x1xi32>
      %95 = arith.sitofp %94 : vector<4x1xi32> to vector<4x1xf32>
      %96 = vector.broadcast %78 : f32 to vector<4x1xf32>
      %97 = arith.mulf %95, %96 : vector<4x1xf32>
      %98 = math.floor %97 : vector<4x1xf32>
      %99 = arith.fptosi %98 : vector<4x1xf32> to vector<4x1xi32>
      %100 = arith.addi %91, %99 : vector<4x1xi32>
      %c512_i32_36 = arith.constant 512 : i32
      %101 = vector.broadcast %c512_i32_36 : i32 to vector<4x1xi32>
      %102 = arith.muli %99, %101 : vector<4x1xi32>
      %103 = arith.subi %94, %102 : vector<4x1xi32>
      %c512_i32_37 = arith.constant 512 : i32
      %104 = vector.broadcast %c512_i32_37 : i32 to vector<4x1xi32>
      %105 = arith.cmpi sge, %103, %104 : vector<4x1xi32>
      %106 = arith.extui %105 : vector<4x1xi1> to vector<4x1xi32>
      %107 = arith.addi %100, %106 : vector<4x1xi32>
      %c0_i32_38 = arith.constant 0 : i32
      %108 = vector.broadcast %c0_i32_38 : i32 to vector<4x1xi32>
      %109 = arith.cmpi slt, %103, %108 : vector<4x1xi32>
      %110 = arith.extui %109 : vector<4x1xi1> to vector<4x1xi32>
      %111 = arith.subi %107, %110 : vector<4x1xi32>
      %112 = tpu.iota {dimensions = array<i32: 0>} : vector<4x1xi32>
      %113 = tpu.iota {dimensions = array<i32: 1>} : vector<4x1xi32>
      %c1_i32_39 = arith.constant 1 : i32
      %114 = vector.broadcast %c1_i32_39 : i32 to vector<4x1xi32>
      %115 = arith.muli %112, %114 : vector<4x1xi32>
      %116 = arith.addi %115, %113 : vector<4x1xi32>
      %c16777619_i32_40 = arith.constant 16777619 : i32
      %117 = vector.broadcast %c16777619_i32_40 : i32 to vector<4x1xi32>
      %118 = arith.muli %116, %117 : vector<4x1xi32>
      %119 = vector.broadcast %22 : i32 to vector<4x1xi32>
      %120 = arith.addi %118, %119 : vector<4x1xi32>
      %c16_i32_41 = arith.constant 16 : i32
      %121 = vector.broadcast %c16_i32_41 : i32 to vector<4x1xi32>
      %122 = arith.shrui %120, %121 : vector<4x1xi32>
      %123 = arith.xori %120, %122 : vector<4x1xi32>
      %c2146121005_i32_42 = arith.constant 2146121005 : i32
      %124 = vector.broadcast %c2146121005_i32_42 : i32 to vector<4x1xi32>
      %125 = arith.muli %123, %124 : vector<4x1xi32>
      %c15_i32_43 = arith.constant 15 : i32
      %126 = vector.broadcast %c15_i32_43 : i32 to vector<4x1xi32>
      %127 = arith.shrui %125, %126 : vector<4x1xi32>
      %128 = arith.xori %125, %127 : vector<4x1xi32>
      %c-2073254261_i32_44 = arith.constant -2073254261 : i32
      %129 = vector.broadcast %c-2073254261_i32_44 : i32 to vector<4x1xi32>
      %130 = arith.muli %128, %129 : vector<4x1xi32>
      %c16_i32_45 = arith.constant 16 : i32
      %131 = vector.broadcast %c16_i32_45 : i32 to vector<4x1xi32>
      %132 = arith.shrui %130, %131 : vector<4x1xi32>
      %133 = arith.xori %130, %132 : vector<4x1xi32>
      %cst_46 = arith.constant 1.000000e+00 : f32
      %cst_47 = arith.constant 5.120000e+02 : f32
      %134 = arith.divf %cst_46, %cst_47 : f32
      %c8_i32_48 = arith.constant 8 : i32
      %135 = vector.broadcast %c8_i32_48 : i32 to vector<4x1xi32>
      %136 = arith.shrui %133, %135 : vector<4x1xi32>
      %137 = arith.sitofp %136 : vector<4x1xi32> to vector<4x1xf32>
      %cst_49 = arith.constant 5.120000e+02 : f32
      %cst_50 = arith.constant 5.96046448E-8 : f32
      %138 = arith.mulf %cst_49, %cst_50 : f32
      %139 = vector.broadcast %138 : f32 to vector<4x1xf32>
      %140 = arith.mulf %137, %139 : vector<4x1xf32>
      %141 = arith.fptosi %140 : vector<4x1xf32> to vector<4x1xi32>
      %142 = arith.addi %55, %141 : vector<4x1xi32>
      %143 = arith.sitofp %142 : vector<4x1xi32> to vector<4x1xf32>
      %144 = vector.broadcast %134 : f32 to vector<4x1xf32>
      %145 = arith.mulf %143, %144 : vector<4x1xf32>
      %146 = math.floor %145 : vector<4x1xf32>
      %147 = arith.fptosi %146 : vector<4x1xf32> to vector<4x1xi32>
      %c512_i32_51 = arith.constant 512 : i32
      %148 = vector.broadcast %c512_i32_51 : i32 to vector<4x1xi32>
      %149 = arith.muli %147, %148 : vector<4x1xi32>
      %150 = arith.subi %142, %149 : vector<4x1xi32>
      %151 = arith.sitofp %150 : vector<4x1xi32> to vector<4x1xf32>
      %152 = vector.broadcast %134 : f32 to vector<4x1xf32>
      %153 = arith.mulf %151, %152 : vector<4x1xf32>
      %154 = math.floor %153 : vector<4x1xf32>
      %155 = arith.fptosi %154 : vector<4x1xf32> to vector<4x1xi32>
      %156 = arith.addi %147, %155 : vector<4x1xi32>
      %c512_i32_52 = arith.constant 512 : i32
      %157 = vector.broadcast %c512_i32_52 : i32 to vector<4x1xi32>
      %158 = arith.muli %155, %157 : vector<4x1xi32>
      %159 = arith.subi %150, %158 : vector<4x1xi32>
      %c512_i32_53 = arith.constant 512 : i32
      %160 = vector.broadcast %c512_i32_53 : i32 to vector<4x1xi32>
      %161 = arith.cmpi sge, %159, %160 : vector<4x1xi32>
      %162 = arith.extui %161 : vector<4x1xi1> to vector<4x1xi32>
      %163 = arith.addi %156, %162 : vector<4x1xi32>
      %c0_i32_54 = arith.constant 0 : i32
      %164 = vector.broadcast %c0_i32_54 : i32 to vector<4x1xi32>
      %165 = arith.cmpi slt, %159, %164 : vector<4x1xi32>
      %166 = arith.extui %165 : vector<4x1xi1> to vector<4x1xi32>
      %167 = arith.subi %163, %166 : vector<4x1xi32>
      %168 = arith.muli %111, %111 : vector<4x1xi32>
      %169 = tpu.iota {dimensions = array<i32: 0>} : vector<4x1xi32>
      %170 = tpu.iota {dimensions = array<i32: 1>} : vector<4x1xi32>
      %c1_i32_55 = arith.constant 1 : i32
      %171 = vector.broadcast %c1_i32_55 : i32 to vector<4x1xi32>
      %172 = arith.muli %169, %171 : vector<4x1xi32>
      %173 = arith.addi %172, %170 : vector<4x1xi32>
      %c16777619_i32_56 = arith.constant 16777619 : i32
      %174 = vector.broadcast %c16777619_i32_56 : i32 to vector<4x1xi32>
      %175 = arith.muli %173, %174 : vector<4x1xi32>
      %176 = vector.broadcast %26 : i32 to vector<4x1xi32>
      %177 = arith.addi %175, %176 : vector<4x1xi32>
      %c16_i32_57 = arith.constant 16 : i32
      %178 = vector.broadcast %c16_i32_57 : i32 to vector<4x1xi32>
      %179 = arith.shrui %177, %178 : vector<4x1xi32>
      %180 = arith.xori %177, %179 : vector<4x1xi32>
      %c2146121005_i32_58 = arith.constant 2146121005 : i32
      %181 = vector.broadcast %c2146121005_i32_58 : i32 to vector<4x1xi32>
      %182 = arith.muli %180, %181 : vector<4x1xi32>
      %c15_i32_59 = arith.constant 15 : i32
      %183 = vector.broadcast %c15_i32_59 : i32 to vector<4x1xi32>
      %184 = arith.shrui %182, %183 : vector<4x1xi32>
      %185 = arith.xori %182, %184 : vector<4x1xi32>
      %c-2073254261_i32_60 = arith.constant -2073254261 : i32
      %186 = vector.broadcast %c-2073254261_i32_60 : i32 to vector<4x1xi32>
      %187 = arith.muli %185, %186 : vector<4x1xi32>
      %c16_i32_61 = arith.constant 16 : i32
      %188 = vector.broadcast %c16_i32_61 : i32 to vector<4x1xi32>
      %189 = arith.shrui %187, %188 : vector<4x1xi32>
      %190 = arith.xori %187, %189 : vector<4x1xi32>
      %c1023_i32 = arith.constant 1023 : i32
      %191 = vector.broadcast %c1023_i32 : i32 to vector<4x1xi32>
      %192 = arith.andi %190, %191 : vector<4x1xi32>
      %c10_i32 = arith.constant 10 : i32
      %193 = vector.broadcast %c10_i32 : i32 to vector<4x1xi32>
      %194 = arith.shrsi %168, %193 : vector<4x1xi32>
      %c1023_i32_62 = arith.constant 1023 : i32
      %195 = vector.broadcast %c1023_i32_62 : i32 to vector<4x1xi32>
      %196 = arith.andi %168, %195 : vector<4x1xi32>
      %197 = arith.cmpi slt, %192, %196 : vector<4x1xi32>
      %198 = arith.extui %197 : vector<4x1xi1> to vector<4x1xi32>
      %199 = arith.addi %194, %198 : vector<4x1xi32>
      %200 = arith.subi %167, %199 : vector<4x1xi32>
      %c0_i32_63 = arith.constant 0 : i32
      %201 = vector.broadcast %c0_i32_63 : i32 to vector<4x1xi32>
      %202 = arith.maxsi %200, %201 : vector<4x1xi32>
      %c1_i32_64 = arith.constant 1 : i32
      %203 = vector.broadcast %c1_i32_64 : i32 to vector<4x1xi32>
      %204 = arith.addi %202, %203 : vector<4x1xi32>
      %c0_i32_65 = arith.constant 0 : i32
      %205 = vector.broadcast %c0_i32_65 : i32 to vector<4x1xi32>
      %c1073741824_i32 = arith.constant 1073741824 : i32
      %206 = vector.broadcast %c1073741824_i32 : i32 to vector<4x1xi32>
      %207 = arith.addi %205, %206 : vector<4x1xi32>
      %208 = arith.cmpi sle, %207, %204 : vector<4x1xi32>
      %209 = arith.subi %204, %205 : vector<4x1xi32>
      %c1073741824_i32_66 = arith.constant 1073741824 : i32
      %210 = vector.broadcast %c1073741824_i32_66 : i32 to vector<4x1xi32>
      %211 = arith.subi %209, %210 : vector<4x1xi32>
      %212 = arith.select %208, %211, %204 : vector<4x1xi1>, vector<4x1xi32>
      %c1_i32_67 = arith.constant 1 : i32
      %213 = vector.broadcast %c1_i32_67 : i32 to vector<4x1xi32>
      %214 = arith.shrsi %205, %213 : vector<4x1xi32>
      %c1073741824_i32_68 = arith.constant 1073741824 : i32
      %c0_i32_69 = arith.constant 0 : i32
      %215 = vector.broadcast %c1073741824_i32_68 : i32 to vector<4x1xi32>
      %216 = vector.broadcast %c0_i32_69 : i32 to vector<4x1xi32>
      %217 = arith.select %208, %215, %216 : vector<4x1xi1>, vector<4x1xi32>
      %218 = arith.addi %214, %217 : vector<4x1xi32>
      %c268435456_i32 = arith.constant 268435456 : i32
      %219 = vector.broadcast %c268435456_i32 : i32 to vector<4x1xi32>
      %220 = arith.addi %218, %219 : vector<4x1xi32>
      %221 = arith.cmpi sle, %220, %212 : vector<4x1xi32>
      %222 = arith.subi %212, %218 : vector<4x1xi32>
      %c268435456_i32_70 = arith.constant 268435456 : i32
      %223 = vector.broadcast %c268435456_i32_70 : i32 to vector<4x1xi32>
      %224 = arith.subi %222, %223 : vector<4x1xi32>
      %225 = arith.select %221, %224, %212 : vector<4x1xi1>, vector<4x1xi32>
      %c1_i32_71 = arith.constant 1 : i32
      %226 = vector.broadcast %c1_i32_71 : i32 to vector<4x1xi32>
      %227 = arith.shrsi %218, %226 : vector<4x1xi32>
      %c268435456_i32_72 = arith.constant 268435456 : i32
      %c0_i32_73 = arith.constant 0 : i32
      %228 = vector.broadcast %c268435456_i32_72 : i32 to vector<4x1xi32>
      %229 = vector.broadcast %c0_i32_73 : i32 to vector<4x1xi32>
      %230 = arith.select %221, %228, %229 : vector<4x1xi1>, vector<4x1xi32>
      %231 = arith.addi %227, %230 : vector<4x1xi32>
      %c67108864_i32 = arith.constant 67108864 : i32
      %232 = vector.broadcast %c67108864_i32 : i32 to vector<4x1xi32>
      %233 = arith.addi %231, %232 : vector<4x1xi32>
      %234 = arith.cmpi sle, %233, %225 : vector<4x1xi32>
      %235 = arith.subi %225, %231 : vector<4x1xi32>
      %c67108864_i32_74 = arith.constant 67108864 : i32
      %236 = vector.broadcast %c67108864_i32_74 : i32 to vector<4x1xi32>
      %237 = arith.subi %235, %236 : vector<4x1xi32>
      %238 = arith.select %234, %237, %225 : vector<4x1xi1>, vector<4x1xi32>
      %c1_i32_75 = arith.constant 1 : i32
      %239 = vector.broadcast %c1_i32_75 : i32 to vector<4x1xi32>
      %240 = arith.shrsi %231, %239 : vector<4x1xi32>
      %c67108864_i32_76 = arith.constant 67108864 : i32
      %c0_i32_77 = arith.constant 0 : i32
      %241 = vector.broadcast %c67108864_i32_76 : i32 to vector<4x1xi32>
      %242 = vector.broadcast %c0_i32_77 : i32 to vector<4x1xi32>
      %243 = arith.select %234, %241, %242 : vector<4x1xi1>, vector<4x1xi32>
      %244 = arith.addi %240, %243 : vector<4x1xi32>
      %c16777216_i32 = arith.constant 16777216 : i32
      %245 = vector.broadcast %c16777216_i32 : i32 to vector<4x1xi32>
      %246 = arith.addi %244, %245 : vector<4x1xi32>
      %247 = arith.cmpi sle, %246, %238 : vector<4x1xi32>
      %248 = arith.subi %238, %244 : vector<4x1xi32>
      %c16777216_i32_78 = arith.constant 16777216 : i32
      %249 = vector.broadcast %c16777216_i32_78 : i32 to vector<4x1xi32>
      %250 = arith.subi %248, %249 : vector<4x1xi32>
      %251 = arith.select %247, %250, %238 : vector<4x1xi1>, vector<4x1xi32>
      %c1_i32_79 = arith.constant 1 : i32
      %252 = vector.broadcast %c1_i32_79 : i32 to vector<4x1xi32>
      %253 = arith.shrsi %244, %252 : vector<4x1xi32>
      %c16777216_i32_80 = arith.constant 16777216 : i32
      %c0_i32_81 = arith.constant 0 : i32
      %254 = vector.broadcast %c16777216_i32_80 : i32 to vector<4x1xi32>
      %255 = vector.broadcast %c0_i32_81 : i32 to vector<4x1xi32>
      %256 = arith.select %247, %254, %255 : vector<4x1xi1>, vector<4x1xi32>
      %257 = arith.addi %253, %256 : vector<4x1xi32>
      %c4194304_i32 = arith.constant 4194304 : i32
      %258 = vector.broadcast %c4194304_i32 : i32 to vector<4x1xi32>
      %259 = arith.addi %257, %258 : vector<4x1xi32>
      %260 = arith.cmpi sle, %259, %251 : vector<4x1xi32>
      %261 = arith.subi %251, %257 : vector<4x1xi32>
      %c4194304_i32_82 = arith.constant 4194304 : i32
      %262 = vector.broadcast %c4194304_i32_82 : i32 to vector<4x1xi32>
      %263 = arith.subi %261, %262 : vector<4x1xi32>
      %264 = arith.select %260, %263, %251 : vector<4x1xi1>, vector<4x1xi32>
      %c1_i32_83 = arith.constant 1 : i32
      %265 = vector.broadcast %c1_i32_83 : i32 to vector<4x1xi32>
      %266 = arith.shrsi %257, %265 : vector<4x1xi32>
      %c4194304_i32_84 = arith.constant 4194304 : i32
      %c0_i32_85 = arith.constant 0 : i32
      %267 = vector.broadcast %c4194304_i32_84 : i32 to vector<4x1xi32>
      %268 = vector.broadcast %c0_i32_85 : i32 to vector<4x1xi32>
      %269 = arith.select %260, %267, %268 : vector<4x1xi1>, vector<4x1xi32>
      %270 = arith.addi %266, %269 : vector<4x1xi32>
      %c1048576_i32 = arith.constant 1048576 : i32
      %271 = vector.broadcast %c1048576_i32 : i32 to vector<4x1xi32>
      %272 = arith.addi %270, %271 : vector<4x1xi32>
      %273 = arith.cmpi sle, %272, %264 : vector<4x1xi32>
      %274 = arith.subi %264, %270 : vector<4x1xi32>
      %c1048576_i32_86 = arith.constant 1048576 : i32
      %275 = vector.broadcast %c1048576_i32_86 : i32 to vector<4x1xi32>
      %276 = arith.subi %274, %275 : vector<4x1xi32>
      %277 = arith.select %273, %276, %264 : vector<4x1xi1>, vector<4x1xi32>
      %c1_i32_87 = arith.constant 1 : i32
      %278 = vector.broadcast %c1_i32_87 : i32 to vector<4x1xi32>
      %279 = arith.shrsi %270, %278 : vector<4x1xi32>
      %c1048576_i32_88 = arith.constant 1048576 : i32
      %c0_i32_89 = arith.constant 0 : i32
      %280 = vector.broadcast %c1048576_i32_88 : i32 to vector<4x1xi32>
      %281 = vector.broadcast %c0_i32_89 : i32 to vector<4x1xi32>
      %282 = arith.select %273, %280, %281 : vector<4x1xi1>, vector<4x1xi32>
      %283 = arith.addi %279, %282 : vector<4x1xi32>
      %c262144_i32 = arith.constant 262144 : i32
      %284 = vector.broadcast %c262144_i32 : i32 to vector<4x1xi32>
      %285 = arith.addi %283, %284 : vector<4x1xi32>
      %286 = arith.cmpi sle, %285, %277 : vector<4x1xi32>
      %287 = arith.subi %277, %283 : vector<4x1xi32>
      %c262144_i32_90 = arith.constant 262144 : i32
      %288 = vector.broadcast %c262144_i32_90 : i32 to vector<4x1xi32>
      %289 = arith.subi %287, %288 : vector<4x1xi32>
      %290 = arith.select %286, %289, %277 : vector<4x1xi1>, vector<4x1xi32>
      %c1_i32_91 = arith.constant 1 : i32
      %291 = vector.broadcast %c1_i32_91 : i32 to vector<4x1xi32>
      %292 = arith.shrsi %283, %291 : vector<4x1xi32>
      %c262144_i32_92 = arith.constant 262144 : i32
      %c0_i32_93 = arith.constant 0 : i32
      %293 = vector.broadcast %c262144_i32_92 : i32 to vector<4x1xi32>
      %294 = vector.broadcast %c0_i32_93 : i32 to vector<4x1xi32>
      %295 = arith.select %286, %293, %294 : vector<4x1xi1>, vector<4x1xi32>
      %296 = arith.addi %292, %295 : vector<4x1xi32>
      %c65536_i32 = arith.constant 65536 : i32
      %297 = vector.broadcast %c65536_i32 : i32 to vector<4x1xi32>
      %298 = arith.addi %296, %297 : vector<4x1xi32>
      %299 = arith.cmpi sle, %298, %290 : vector<4x1xi32>
      %300 = arith.subi %290, %296 : vector<4x1xi32>
      %c65536_i32_94 = arith.constant 65536 : i32
      %301 = vector.broadcast %c65536_i32_94 : i32 to vector<4x1xi32>
      %302 = arith.subi %300, %301 : vector<4x1xi32>
      %303 = arith.select %299, %302, %290 : vector<4x1xi1>, vector<4x1xi32>
      %c1_i32_95 = arith.constant 1 : i32
      %304 = vector.broadcast %c1_i32_95 : i32 to vector<4x1xi32>
      %305 = arith.shrsi %296, %304 : vector<4x1xi32>
      %c65536_i32_96 = arith.constant 65536 : i32
      %c0_i32_97 = arith.constant 0 : i32
      %306 = vector.broadcast %c65536_i32_96 : i32 to vector<4x1xi32>
      %307 = vector.broadcast %c0_i32_97 : i32 to vector<4x1xi32>
      %308 = arith.select %299, %306, %307 : vector<4x1xi1>, vector<4x1xi32>
      %309 = arith.addi %305, %308 : vector<4x1xi32>
      %c16384_i32 = arith.constant 16384 : i32
      %310 = vector.broadcast %c16384_i32 : i32 to vector<4x1xi32>
      %311 = arith.addi %309, %310 : vector<4x1xi32>
      %312 = arith.cmpi sle, %311, %303 : vector<4x1xi32>
      %313 = arith.subi %303, %309 : vector<4x1xi32>
      %c16384_i32_98 = arith.constant 16384 : i32
      %314 = vector.broadcast %c16384_i32_98 : i32 to vector<4x1xi32>
      %315 = arith.subi %313, %314 : vector<4x1xi32>
      %316 = arith.select %312, %315, %303 : vector<4x1xi1>, vector<4x1xi32>
      %c1_i32_99 = arith.constant 1 : i32
      %317 = vector.broadcast %c1_i32_99 : i32 to vector<4x1xi32>
      %318 = arith.shrsi %309, %317 : vector<4x1xi32>
      %c16384_i32_100 = arith.constant 16384 : i32
      %c0_i32_101 = arith.constant 0 : i32
      %319 = vector.broadcast %c16384_i32_100 : i32 to vector<4x1xi32>
      %320 = vector.broadcast %c0_i32_101 : i32 to vector<4x1xi32>
      %321 = arith.select %312, %319, %320 : vector<4x1xi1>, vector<4x1xi32>
      %322 = arith.addi %318, %321 : vector<4x1xi32>
      %c4096_i32 = arith.constant 4096 : i32
      %323 = vector.broadcast %c4096_i32 : i32 to vector<4x1xi32>
      %324 = arith.addi %322, %323 : vector<4x1xi32>
      %325 = arith.cmpi sle, %324, %316 : vector<4x1xi32>
      %326 = arith.subi %316, %322 : vector<4x1xi32>
      %c4096_i32_102 = arith.constant 4096 : i32
      %327 = vector.broadcast %c4096_i32_102 : i32 to vector<4x1xi32>
      %328 = arith.subi %326, %327 : vector<4x1xi32>
      %329 = arith.select %325, %328, %316 : vector<4x1xi1>, vector<4x1xi32>
      %c1_i32_103 = arith.constant 1 : i32
      %330 = vector.broadcast %c1_i32_103 : i32 to vector<4x1xi32>
      %331 = arith.shrsi %322, %330 : vector<4x1xi32>
      %c4096_i32_104 = arith.constant 4096 : i32
      %c0_i32_105 = arith.constant 0 : i32
      %332 = vector.broadcast %c4096_i32_104 : i32 to vector<4x1xi32>
      %333 = vector.broadcast %c0_i32_105 : i32 to vector<4x1xi32>
      %334 = arith.select %325, %332, %333 : vector<4x1xi1>, vector<4x1xi32>
      %335 = arith.addi %331, %334 : vector<4x1xi32>
      %c1024_i32 = arith.constant 1024 : i32
      %336 = vector.broadcast %c1024_i32 : i32 to vector<4x1xi32>
      %337 = arith.addi %335, %336 : vector<4x1xi32>
      %338 = arith.cmpi sle, %337, %329 : vector<4x1xi32>
      %339 = arith.subi %329, %335 : vector<4x1xi32>
      %c1024_i32_106 = arith.constant 1024 : i32
      %340 = vector.broadcast %c1024_i32_106 : i32 to vector<4x1xi32>
      %341 = arith.subi %339, %340 : vector<4x1xi32>
      %342 = arith.select %338, %341, %329 : vector<4x1xi1>, vector<4x1xi32>
      %c1_i32_107 = arith.constant 1 : i32
      %343 = vector.broadcast %c1_i32_107 : i32 to vector<4x1xi32>
      %344 = arith.shrsi %335, %343 : vector<4x1xi32>
      %c1024_i32_108 = arith.constant 1024 : i32
      %c0_i32_109 = arith.constant 0 : i32
      %345 = vector.broadcast %c1024_i32_108 : i32 to vector<4x1xi32>
      %346 = vector.broadcast %c0_i32_109 : i32 to vector<4x1xi32>
      %347 = arith.select %338, %345, %346 : vector<4x1xi1>, vector<4x1xi32>
      %348 = arith.addi %344, %347 : vector<4x1xi32>
      %c256_i32_110 = arith.constant 256 : i32
      %349 = vector.broadcast %c256_i32_110 : i32 to vector<4x1xi32>
      %350 = arith.addi %348, %349 : vector<4x1xi32>
      %351 = arith.cmpi sle, %350, %342 : vector<4x1xi32>
      %352 = arith.subi %342, %348 : vector<4x1xi32>
      %c256_i32_111 = arith.constant 256 : i32
      %353 = vector.broadcast %c256_i32_111 : i32 to vector<4x1xi32>
      %354 = arith.subi %352, %353 : vector<4x1xi32>
      %355 = arith.select %351, %354, %342 : vector<4x1xi1>, vector<4x1xi32>
      %c1_i32_112 = arith.constant 1 : i32
      %356 = vector.broadcast %c1_i32_112 : i32 to vector<4x1xi32>
      %357 = arith.shrsi %348, %356 : vector<4x1xi32>
      %c256_i32_113 = arith.constant 256 : i32
      %c0_i32_114 = arith.constant 0 : i32
      %358 = vector.broadcast %c256_i32_113 : i32 to vector<4x1xi32>
      %359 = vector.broadcast %c0_i32_114 : i32 to vector<4x1xi32>
      %360 = arith.select %351, %358, %359 : vector<4x1xi1>, vector<4x1xi32>
      %361 = arith.addi %357, %360 : vector<4x1xi32>
      %c64_i32 = arith.constant 64 : i32
      %362 = vector.broadcast %c64_i32 : i32 to vector<4x1xi32>
      %363 = arith.addi %361, %362 : vector<4x1xi32>
      %364 = arith.cmpi sle, %363, %355 : vector<4x1xi32>
      %365 = arith.subi %355, %361 : vector<4x1xi32>
      %c64_i32_115 = arith.constant 64 : i32
      %366 = vector.broadcast %c64_i32_115 : i32 to vector<4x1xi32>
      %367 = arith.subi %365, %366 : vector<4x1xi32>
      %368 = arith.select %364, %367, %355 : vector<4x1xi1>, vector<4x1xi32>
      %c1_i32_116 = arith.constant 1 : i32
      %369 = vector.broadcast %c1_i32_116 : i32 to vector<4x1xi32>
      %370 = arith.shrsi %361, %369 : vector<4x1xi32>
      %c64_i32_117 = arith.constant 64 : i32
      %c0_i32_118 = arith.constant 0 : i32
      %371 = vector.broadcast %c64_i32_117 : i32 to vector<4x1xi32>
      %372 = vector.broadcast %c0_i32_118 : i32 to vector<4x1xi32>
      %373 = arith.select %364, %371, %372 : vector<4x1xi1>, vector<4x1xi32>
      %374 = arith.addi %370, %373 : vector<4x1xi32>
      %c16_i32_119 = arith.constant 16 : i32
      %375 = vector.broadcast %c16_i32_119 : i32 to vector<4x1xi32>
      %376 = arith.addi %374, %375 : vector<4x1xi32>
      %377 = arith.cmpi sle, %376, %368 : vector<4x1xi32>
      %378 = arith.subi %368, %374 : vector<4x1xi32>
      %c16_i32_120 = arith.constant 16 : i32
      %379 = vector.broadcast %c16_i32_120 : i32 to vector<4x1xi32>
      %380 = arith.subi %378, %379 : vector<4x1xi32>
      %381 = arith.select %377, %380, %368 : vector<4x1xi1>, vector<4x1xi32>
      %c1_i32_121 = arith.constant 1 : i32
      %382 = vector.broadcast %c1_i32_121 : i32 to vector<4x1xi32>
      %383 = arith.shrsi %374, %382 : vector<4x1xi32>
      %c16_i32_122 = arith.constant 16 : i32
      %c0_i32_123 = arith.constant 0 : i32
      %384 = vector.broadcast %c16_i32_122 : i32 to vector<4x1xi32>
      %385 = vector.broadcast %c0_i32_123 : i32 to vector<4x1xi32>
      %386 = arith.select %377, %384, %385 : vector<4x1xi1>, vector<4x1xi32>
      %387 = arith.addi %383, %386 : vector<4x1xi32>
      %c4_i32 = arith.constant 4 : i32
      %388 = vector.broadcast %c4_i32 : i32 to vector<4x1xi32>
      %389 = arith.addi %387, %388 : vector<4x1xi32>
      %390 = arith.cmpi sle, %389, %381 : vector<4x1xi32>
      %391 = arith.subi %381, %387 : vector<4x1xi32>
      %c4_i32_124 = arith.constant 4 : i32
      %392 = vector.broadcast %c4_i32_124 : i32 to vector<4x1xi32>
      %393 = arith.subi %391, %392 : vector<4x1xi32>
      %394 = arith.select %390, %393, %381 : vector<4x1xi1>, vector<4x1xi32>
      %c1_i32_125 = arith.constant 1 : i32
      %395 = vector.broadcast %c1_i32_125 : i32 to vector<4x1xi32>
      %396 = arith.shrsi %387, %395 : vector<4x1xi32>
      %c4_i32_126 = arith.constant 4 : i32
      %c0_i32_127 = arith.constant 0 : i32
      %397 = vector.broadcast %c4_i32_126 : i32 to vector<4x1xi32>
      %398 = vector.broadcast %c0_i32_127 : i32 to vector<4x1xi32>
      %399 = arith.select %390, %397, %398 : vector<4x1xi1>, vector<4x1xi32>
      %400 = arith.addi %396, %399 : vector<4x1xi32>
      %c1_i32_128 = arith.constant 1 : i32
      %401 = vector.broadcast %c1_i32_128 : i32 to vector<4x1xi32>
      %402 = arith.addi %400, %401 : vector<4x1xi32>
      %403 = arith.cmpi sle, %402, %394 : vector<4x1xi32>
      %c1_i32_129 = arith.constant 1 : i32
      %404 = vector.broadcast %c1_i32_129 : i32 to vector<4x1xi32>
      %405 = arith.shrsi %400, %404 : vector<4x1xi32>
      %c1_i32_130 = arith.constant 1 : i32
      %c0_i32_131 = arith.constant 0 : i32
      %406 = vector.broadcast %c1_i32_130 : i32 to vector<4x1xi32>
      %407 = vector.broadcast %c0_i32_131 : i32 to vector<4x1xi32>
      %408 = arith.select %403, %406, %407 : vector<4x1xi1>, vector<4x1xi32>
      %409 = arith.addi %405, %408 : vector<4x1xi32>
      %c32_i32 = arith.constant 32 : i32
      %410 = vector.broadcast %c32_i32 : i32 to vector<4x1xi32>
      %411 = arith.muli %409, %410 : vector<4x1xi32>
      %c0_132 = arith.constant 0 : index
      %c0_133 = arith.constant 0 : index
      %412 = vector.load %arg6[%c0_132, %c0_133] : memref<4x1xi32, #tpu.memory_space<vmem>>, vector<4x1xi32>
      tpu.vector_store %arg6[%c0_132, %c0_133], %111 {strides = array<i32>} : memref<4x1xi32, #tpu.memory_space<vmem>>, vector<4x1xi32>,
      %c0_134 = arith.constant 0 : index
      %c0_135 = arith.constant 0 : index
      %413 = vector.load %arg7[%c0_134, %c0_135] : memref<4x1xi32, #tpu.memory_space<vmem>>, vector<4x1xi32>
      tpu.vector_store %arg7[%c0_134, %c0_135], %411 {strides = array<i32>} : memref<4x1xi32, #tpu.memory_space<vmem>>, vector<4x1xi32>,
      %c0_136 = arith.constant 0 : index
      %c0_137 = arith.constant 0 : index
      %414 = vector.load %arg5[%c0_136, %c0_137] : memref<4x2xi32, #tpu.memory_space<vmem>>, vector<4x1xi32>
      %c0_138 = arith.constant 0 : index
      %c1 = arith.constant 1 : index
      %415 = vector.load %arg5[%c0_138, %c1] : memref<4x2xi32, #tpu.memory_space<vmem>>, vector<4x1xi32>
      %c896_i32 = arith.constant 896 : i32
      %416 = vector.broadcast %c896_i32 : i32 to vector<4x1xi32>
      %417 = arith.muli %416, %414 : vector<4x1xi32>
      %c128_i32 = arith.constant 128 : i32
      %418 = vector.broadcast %c128_i32 : i32 to vector<4x1xi32>
      %419 = arith.muli %418, %111 : vector<4x1xi32>
      %420 = arith.addi %417, %419 : vector<4x1xi32>
      %421 = tpu.iota {dimensions = array<i32: 0>} : vector<4x1xi32>
      %422 = tpu.iota {dimensions = array<i32: 1>} : vector<4x1xi32>
      %c1_i32_139 = arith.constant 1 : i32
      %423 = vector.broadcast %c1_i32_139 : i32 to vector<4x1xi32>
      %424 = arith.muli %421, %423 : vector<4x1xi32>
      %425 = arith.addi %424, %422 : vector<4x1xi32>
      %c16777619_i32_140 = arith.constant 16777619 : i32
      %426 = vector.broadcast %c16777619_i32_140 : i32 to vector<4x1xi32>
      %427 = arith.muli %425, %426 : vector<4x1xi32>
      %428 = vector.broadcast %30 : i32 to vector<4x1xi32>
      %429 = arith.addi %427, %428 : vector<4x1xi32>
      %c16_i32_141 = arith.constant 16 : i32
      %430 = vector.broadcast %c16_i32_141 : i32 to vector<4x1xi32>
      %431 = arith.shrui %429, %430 : vector<4x1xi32>
      %432 = arith.xori %429, %431 : vector<4x1xi32>
      %c2146121005_i32_142 = arith.constant 2146121005 : i32
      %433 = vector.broadcast %c2146121005_i32_142 : i32 to vector<4x1xi32>
      %434 = arith.muli %432, %433 : vector<4x1xi32>
      %c15_i32_143 = arith.constant 15 : i32
      %435 = vector.broadcast %c15_i32_143 : i32 to vector<4x1xi32>
      %436 = arith.shrui %434, %435 : vector<4x1xi32>
      %437 = arith.xori %434, %436 : vector<4x1xi32>
      %c-2073254261_i32_144 = arith.constant -2073254261 : i32
      %438 = vector.broadcast %c-2073254261_i32_144 : i32 to vector<4x1xi32>
      %439 = arith.muli %437, %438 : vector<4x1xi32>
      %c16_i32_145 = arith.constant 16 : i32
      %440 = vector.broadcast %c16_i32_145 : i32 to vector<4x1xi32>
      %441 = arith.shrui %439, %440 : vector<4x1xi32>
      %442 = arith.xori %439, %441 : vector<4x1xi32>
      %c1023_i32_146 = arith.constant 1023 : i32
      %443 = vector.broadcast %c1023_i32_146 : i32 to vector<4x1xi32>
      %444 = arith.andi %442, %443 : vector<4x1xi32>
      %c10_i32_147 = arith.constant 10 : i32
      %445 = vector.broadcast %c10_i32_147 : i32 to vector<4x1xi32>
      %446 = arith.shrsi %420, %445 : vector<4x1xi32>
      %c1023_i32_148 = arith.constant 1023 : i32
      %447 = vector.broadcast %c1023_i32_148 : i32 to vector<4x1xi32>
      %448 = arith.andi %420, %447 : vector<4x1xi32>
      %449 = arith.cmpi slt, %444, %448 : vector<4x1xi32>
      %450 = arith.extui %449 : vector<4x1xi1> to vector<4x1xi32>
      %451 = arith.addi %446, %450 : vector<4x1xi32>
      %c0_149 = arith.constant 0 : index
      %c0_150 = arith.constant 0 : index
      %452 = vector.load %arg8[%c0_149, %c0_150] : memref<4x1xi32, #tpu.memory_space<vmem>>, vector<4x1xi32>
      tpu.vector_store %arg8[%c0_149, %c0_150], %451 {strides = array<i32>} : memref<4x1xi32, #tpu.memory_space<vmem>>, vector<4x1xi32>,
      %c896_i32_151 = arith.constant 896 : i32
      %453 = vector.broadcast %c896_i32_151 : i32 to vector<4x1xi32>
      %454 = arith.muli %453, %415 : vector<4x1xi32>
      %c128_i32_152 = arith.constant 128 : i32
      %455 = vector.broadcast %c128_i32_152 : i32 to vector<4x1xi32>
      %456 = arith.muli %455, %411 : vector<4x1xi32>
      %457 = arith.addi %454, %456 : vector<4x1xi32>
      %458 = tpu.iota {dimensions = array<i32: 0>} : vector<4x1xi32>
      %459 = tpu.iota {dimensions = array<i32: 1>} : vector<4x1xi32>
      %c1_i32_153 = arith.constant 1 : i32
      %460 = vector.broadcast %c1_i32_153 : i32 to vector<4x1xi32>
      %461 = arith.muli %458, %460 : vector<4x1xi32>
      %462 = arith.addi %461, %459 : vector<4x1xi32>
      %c16777619_i32_154 = arith.constant 16777619 : i32
      %463 = vector.broadcast %c16777619_i32_154 : i32 to vector<4x1xi32>
      %464 = arith.muli %462, %463 : vector<4x1xi32>
      %465 = vector.broadcast %34 : i32 to vector<4x1xi32>
      %466 = arith.addi %464, %465 : vector<4x1xi32>
      %c16_i32_155 = arith.constant 16 : i32
      %467 = vector.broadcast %c16_i32_155 : i32 to vector<4x1xi32>
      %468 = arith.shrui %466, %467 : vector<4x1xi32>
      %469 = arith.xori %466, %468 : vector<4x1xi32>
      %c2146121005_i32_156 = arith.constant 2146121005 : i32
      %470 = vector.broadcast %c2146121005_i32_156 : i32 to vector<4x1xi32>
      %471 = arith.muli %469, %470 : vector<4x1xi32>
      %c15_i32_157 = arith.constant 15 : i32
      %472 = vector.broadcast %c15_i32_157 : i32 to vector<4x1xi32>
      %473 = arith.shrui %471, %472 : vector<4x1xi32>
      %474 = arith.xori %471, %473 : vector<4x1xi32>
      %c-2073254261_i32_158 = arith.constant -2073254261 : i32
      %475 = vector.broadcast %c-2073254261_i32_158 : i32 to vector<4x1xi32>
      %476 = arith.muli %474, %475 : vector<4x1xi32>
      %c16_i32_159 = arith.constant 16 : i32
      %477 = vector.broadcast %c16_i32_159 : i32 to vector<4x1xi32>
      %478 = arith.shrui %476, %477 : vector<4x1xi32>
      %479 = arith.xori %476, %478 : vector<4x1xi32>
      %c1023_i32_160 = arith.constant 1023 : i32
      %480 = vector.broadcast %c1023_i32_160 : i32 to vector<4x1xi32>
      %481 = arith.andi %479, %480 : vector<4x1xi32>
      %c10_i32_161 = arith.constant 10 : i32
      %482 = vector.broadcast %c10_i32_161 : i32 to vector<4x1xi32>
      %483 = arith.shrsi %457, %482 : vector<4x1xi32>
      %c1023_i32_162 = arith.constant 1023 : i32
      %484 = vector.broadcast %c1023_i32_162 : i32 to vector<4x1xi32>
      %485 = arith.andi %457, %484 : vector<4x1xi32>
      %486 = arith.cmpi slt, %481, %485 : vector<4x1xi32>
      %487 = arith.extui %486 : vector<4x1xi1> to vector<4x1xi32>
      %488 = arith.addi %483, %487 : vector<4x1xi32>
      %c0_163 = arith.constant 0 : index
      %c0_164 = arith.constant 0 : index
      %489 = vector.load %arg9[%c0_163, %c0_164] : memref<4x1xi32, #tpu.memory_space<vmem>>, vector<4x1xi32>
      tpu.vector_store %arg9[%c0_163, %c0_164], %488 {strides = array<i32>} : memref<4x1xi32, #tpu.memory_space<vmem>>, vector<4x1xi32>,
    } else {
    }
    return
  }
  func.func @transform_0(%arg0: i32, %arg1: i32, %arg2: i32, %arg3: memref<1xi32, #tpu.memory_space<smem>>) -> (i32, i32, i32) {
    %c0_i32 = arith.constant 0 : i32
    return %arg1, %arg0, %arg2 : i32, i32, i32
  }
  func.func @transform_1(%arg0: i32, %arg1: i32, %arg2: i32, %arg3: memref<1xi32, #tpu.memory_space<smem>>) -> (i32, i32) {
    %c0_i32 = arith.constant 0 : i32
    %c0_i32_0 = arith.constant 0 : i32
    return %arg0, %c0_i32 : i32, i32
  }
  func.func @transform_2(%arg0: i32, %arg1: i32, %arg2: i32, %arg3: memref<1xi32, #tpu.memory_space<smem>>) -> (i32, i32) {
    %c0_i32 = arith.constant 0 : i32
    %c0_i32_0 = arith.constant 0 : i32
    return %arg0, %c0_i32 : i32, i32
  }
  func.func @transform_3(%arg0: i32, %arg1: i32, %arg2: i32, %arg3: memref<1xi32, #tpu.memory_space<smem>>) -> (i32, i32) {
    %c0_i32 = arith.constant 0 : i32
    %c0_i32_0 = arith.constant 0 : i32
    return %arg0, %c0_i32 : i32, i32
  }
  func.func @transform_4(%arg0: i32, %arg1: i32, %arg2: i32, %arg3: memref<1xi32, #tpu.memory_space<smem>>) -> (i32, i32) {
    %c0_i32 = arith.constant 0 : i32
    %c0_i32_0 = arith.constant 0 : i32
    return %arg0, %c0_i32 : i32, i32
  }
  func.func @transform_5(%arg0: i32, %arg1: i32, %arg2: i32, %arg3: memref<1xi32, #tpu.memory_space<smem>>) -> (i32, i32) {
    %c0_i32 = arith.constant 0 : i32
    %c0_i32_0 = arith.constant 0 : i32
    return %arg0, %c0_i32 : i32, i32
  }
}

</mosaic_0001>

<llo_original>
// kernel: tpu_custom_call.1
$region0: #{tpu_custom_call.1}
  #allocation0 [shape = 'u32[]', space=smem, size = 0x4, offset = 0x4, fixed_abs, tag = 'smem constant byte address 0x4 - core index']
  #allocation1 [shape = 'u32[144,128]{1,0:T(1,128)}', space=vmem, size = 0x12000, scoped, tag = 'internal scratch']
  #allocation2 [shape = 's32[4,128]{1,0:T(4,128)}', space=vmem, size = 0x800, scoped, tag = 'scratch operand']
  #allocation3 [shape = 's32[4,128]{1,0:T(4,128)}', space=vmem, size = 0x800, scoped, tag = 'scratch operand']
  #allocation4 [shape = 's32[1]{0}', space=sflag, size = 0x4, scoped, tag = 'scoped memory for tpu_custom_call.1']
  #allocation5 [shape = 's32[1]{0:T(128)S(6)}', space=smem, size = 0x200, scoped, tag = 'prefetched SMEM operand 0']
  %s0 = inlined_call_operand.<no memory space> [shape: s32[1], index: 0, kind: input, shape index: {}]
  %s1 = inlined_call_operand.hbm [shape: s32[2,4,256], index: 1, kind: input, shape index: {}]
  %s2 = inlined_call_operand.vmem [shape: s32[4,2], index: 2, kind: input, shape index: {}]
  %s3 = inlined_call_operand.vmem [shape: s32[4,1], index: 3, kind: output, shape index: {0}]
  %s4 = inlined_call_operand.vmem [shape: s32[4,1], index: 4, kind: output, shape index: {1}]
  %s5 = inlined_call_operand.vmem [shape: s32[4,1], index: 5, kind: output, shape index: {2}]
  %s6 = inlined_call_operand.vmem [shape: s32[4,1], index: 6, kind: output, shape index: {3}]
  %7 = xla_tuple %s3, %s4, %s5, %s6
  %s8 = sld [smem:[#allocation0]]
  $region61: #{tpu_custom_call.1} parent=0
    _
  %s10 = ssub.s32 1, %s8
  %s11 = scalar_select 0, %s10, %s8
  %12 = sst [smem:[#allocation5]] %s0
  $region1: #{tpu_custom_call.1} parent=0
    #allocation6 [shape = 'u8[8192]{0}', space=vmem, size = 0x2000, scoped, tag = 'input window, operand 1, single buffered']
    #allocation7 [shape = 's32[1]{0}', space=sflag, size = 0x4, scoped, tag = 'scoped memory for tpu_custom_call.1']
    %13 = vsyncpa [#allocation7], 0
    // Predicated region
    $region2: #{tpu_custom_call.1} parent=1 // pred_check
      _
    $region3: #{tpu_custom_call.1} parent=1 // pred_check_branch
      %15 = sbr.rel (0) target = $region5
    $region4: #{tpu_custom_call.1} parent=1 // pred_region
      %s17 = ssub.s32 256, 256
      %18 = vsyncadd [#allocation7], %s17
      %s19 = sshll.u32 [#allocation6], 4
      %s20 = int_to_ptr.vmem [resolvable:$true] %s19
      %25 = dma.hbm_to_vmem [thread:$0]  %s1, 256, %s20, [#allocation7], 128, 128, 8
    $region5: #{tpu_custom_call.1} parent=1 // pred_fallthru
      _
    // Predicated region
    $region6: #{tpu_custom_call.1} parent=1 // pred_check
      _
    $region7: #{tpu_custom_call.1} parent=1 // pred_check_branch
      %27 = sbr.rel (0) target = $region9
    $region8: #{tpu_custom_call.1} parent=1 // pred_region
      _
    $region9: #{tpu_custom_call.1} parent=1 // pred_fallthru
      _
    // Predicated region
    $region10: #{tpu_custom_call.1} parent=1 // pred_check
      _
    $region11: #{tpu_custom_call.1} parent=1 // pred_check_branch
      %29 = sbr.rel (0) target = $region13
    $region12: #{tpu_custom_call.1} parent=1 // pred_region
      %30 = dma.done [#allocation7], 256
    $region13: #{tpu_custom_call.1} parent=1 // pred_fallthru
      _
    %p31 = scmp.eq.s32.totalorder 0, 0
    %p32 = scmp.eq.s32.totalorder 0, 0
    %p33 = pnand %p31, %p32
    %p34 = pneg %p33
    %s35 = sadd.s32 0, 0
    %s36 = sadd.s32 %s35, 0
    %s37 = sld [smem:[#allocation5]]
    %s38 = smul.u32 %s37, 2654435769
    %s39 = smul.u32 %s36, 2246822507
    %s40 = sadd.s32 %s38, %s39
    %s41 = sadd.s32 %s40, 3266489909
    %s42 = sadd.s32 %s40, 2238012522
    %s43 = sadd.s32 %s40, 1209535135
    %s44 = sadd.s32 %s40, 181057748
    %s45 = sadd.s32 %s40, 3447547657
    %v46 = vlaneseq
    %v47 = vshrl.u32 %v46, 7
    %v48 = vlaneseq
    %v49 = vand.u32 %v48, 127
    %v50 = vmul.u32 %v47, 256
    %v51 = vadd.s32 %v50, %v49
    %v52 = vmul.u32 %v51, 16777619
    // Predicated region
    $region14: #{tpu_custom_call.1} parent=1 // pred_check
      _
    $region15: #{tpu_custom_call.1} parent=1 // pred_check_branch
      %54 = sbr.rel (%p33) target = $region17
    $region16: #{tpu_custom_call.1} parent=1 // pred_region
      %55 = vst [vmem:[#allocation2] sm:$0xf] 0
      %56 = vst [vmem:[#allocation3] sm:$0xf] 0
    $region17: #{tpu_custom_call.1} parent=1 // pred_fallthru
      _
    %v57 = vld [vmem:[#allocation2] sm:$0xf]
    %v58 = vld [vmem:[#allocation3] sm:$0xf]
    loop: start=0, step=1, limit=2
    $region18: #{tpu_custom_call.1} parent=1 // loop_pre_header
      _
    $region19: #{tpu_custom_call.1} parent=1 // loop_header
      %s60 = sphi 0, %s64
      %p61 = scmp.ge.s32.totalorder %s60, 2
      %v65 = vphi %v57, %v115
      %v66 = vphi %v58, %v116
    $region20: #{tpu_custom_call.1} parent=1 // loop_header_branch
      %63 = sbr.rel (%p61) target = $region24
    $region21: #{tpu_custom_call.1} parent=1 // loop_body
      %s67 = smul.u32 %s60, 1024
      %s68 = smul.u32 %s60, 2
      %s69 = smul.addr %s68, 4
      %s70 = scalar_lea.vmem [#allocation6], %s69
      %v71 = vld [vmem:[%s70] sm:$0xf]
      %s72 = smul.u32 %s60, 412672
      %v73 = vstv %s72
      %v74 = vadd.s32 %v52, %v73
      %v75 = vstv %s40
      %v76 = vadd.s32 %v74, %v75
      %v77 = vshrl.u32 %v76, 16
      %v78 = vxor.u32 %v76, %v77
      %v79 = vmul.u32 %v78, 2146121005
      %v80 = vshrl.u32 %v79, 15
      %v81 = vxor.u32 %v79, %v80
      %v82 = vmul.u32 %v81, 2221713035
      %v83 = vshrl.u32 %v82, 16
      %v84 = vxor.u32 %v82, %v83
      %v85 = vand.u32 %v84, 1023
      %v86 = vmul.u32 %v71, %v71
      %v87 = vshra.s32 %v86, 10
      %v88 = vand.u32 %v86, 1023
      %vm89 = vcmp.lt.s32.totalorder %v85, %v88
      %v90 = vsel %vm89, 1, 0
      %v91 = vadd.s32 %v87, %v90
      %v92 = vadd.s32 %v65, %v71
      %v93 = vadd.s32 %v66, %v91
      %v94 = vld [vmem:[%s70 + $0x4] sm:$0xf]
      %s95 = sadd.s32 %s67, 128
      %s96 = smul.u32 %s95, 16777619
      %v97 = vstv %s96
      %v98 = vadd.s32 %v52, %v97
      %v99 = vadd.s32 %v98, %v75
      %v100 = vshrl.u32 %v99, 16
      %v101 = vxor.u32 %v99, %v100
      %v102 = vmul.u32 %v101, 2146121005
      %v103 = vshrl.u32 %v102, 15
      %v104 = vxor.u32 %v102, %v103
      %v105 = vmul.u32 %v104, 2221713035
      %v106 = vshrl.u32 %v105, 16
      %v107 = vxor.u32 %v105, %v106
      %v108 = vand.u32 %v107, 1023
      %v109 = vmul.u32 %v94, %v94
      %v110 = vshra.s32 %v109, 10
      %v111 = vand.u32 %v109, 1023
      %vm112 = vcmp.lt.s32.totalorder %v108, %v111
      %v113 = vsel %vm112, 1, 0
      %v114 = vadd.s32 %v110, %v113
      %v115 = vadd.s32 %v92, %v94
      %v116 = vadd.s32 %v93, %v114
    $region22: #{tpu_custom_call.1} parent=1 // loop_footer
      %s64 = sadd.s32 1, %s60
    $region23: #{tpu_custom_call.1} parent=1 // loop_footer_branch
      %59 = sbr.rel target = $region19
    $region24: #{tpu_custom_call.1} parent=1 // loop_exit
      _
    %117 = vst [vmem:[#allocation2] sm:$0xf] %v65
    %118 = vst [vmem:[#allocation3] sm:$0xf] %v66
    // Predicated region
    $region25: #{tpu_custom_call.1} parent=1 // pred_check
      _
    $region26: #{tpu_custom_call.1} parent=1 // pred_check_branch
      %120 = sbr.rel (%p33) target = $region28
    $region27: #{tpu_custom_call.1} parent=1 // pred_region
      %vm121 = vcmask 1043456
      %v122 = vsel %vm121, %v65, 0
      %v123 = vand.u32 %v122, 65535
      %v124 = vshrl.u32 %v122, 16
      %v125 = vcvt.s32.f32 %v123
      %v126 = vcvt.s32.f32 %v124
      %127 = vadd.xlane.f32.xlu0 %v125
      %v128 = vpop.xlane.xlu0 %127
      %129 = vadd.xlane.f32.xlu0 %v126
      %v130 = vpop.xlane.xlu0 %129
      %v131 = vcvt.f32.s32 %v128
      %v132 = vcvt.f32.s32 %v130
      %v133 = vshll.u32 %v132, 16
      %v134 = vadd.s32 %v133, %v131
      %v135 = vsel %vm121, %v66, 0
      %v136 = vand.u32 %v135, 65535
      %v137 = vshrl.u32 %v135, 16
      %v138 = vcvt.s32.f32 %v136
      %v139 = vcvt.s32.f32 %v137
      %140 = vadd.xlane.f32.xlu0 %v138
      %v141 = vpop.xlane.xlu0 %140
      %142 = vadd.xlane.f32.xlu0 %v139
      %v143 = vpop.xlane.xlu0 %142
      %v144 = vcvt.f32.s32 %v141
      %v145 = vcvt.f32.s32 %v143
      %v146 = vshll.u32 %v145, 16
      %v147 = vadd.s32 %v146, %v144
      %v148 = vadd.s32 %v47, %v49
      %v149 = vmul.u32 %v148, 16777619
      %v150 = vstv %s41
      %v151 = vadd.s32 %v149, %v150
      %v152 = vshrl.u32 %v151, 16
      %v153 = vxor.u32 %v151, %v152
      %v154 = vmul.u32 %v153, 2146121005
      %v155 = vshrl.u32 %v154, 15
      %v156 = vxor.u32 %v154, %v155
      %v157 = vmul.u32 %v156, 2221713035
      %v158 = vshrl.u32 %v157, 16
      %v159 = vxor.u32 %v157, %v158
      %v160 = vshrl.u32 %v159, 8
      %v161 = vcvt.s32.f32 %v160
      %v162 = vmul.f32 %v161, 3.0517578e-05
      %v163 = vcvt.f32.s32.to.zero.pseudo %v162
      %v164 = vadd.s32 %v134, %v163
      %v165 = vcvt.s32.f32 %v164
      %v166 = vmul.f32 %v165, 0.001953125
      %v167 = vfloor.f32 %v166
      %v168 = vcvt.f32.s32.to.zero.pseudo %v167
      %v169 = vmul.u32 %v168, 512
      %v170 = vsub.s32 %v164, %v169
      %v171 = vcvt.s32.f32 %v170
      %v172 = vmul.f32 %v171, 0.001953125
      %v173 = vfloor.f32 %v172
      %v174 = vcvt.f32.s32.to.zero.pseudo %v173
      %v175 = vadd.s32 %v168, %v174
      %v176 = vmul.u32 %v174, 512
      %v177 = vsub.s32 %v170, %v176
      %vm178 = vcmp.ge.s32.totalorder %v177, 512
      %v179 = vsel %vm178, 1, 0
      %v180 = vadd.s32 %v175, %v179
      %vm181 = vcmp.lt.s32.totalorder %v177, 0
      %v182 = vsel %vm181, 1, 0
      %v183 = vsub.s32 %v180, %v182
      %v184 = vstv %s42
      %v185 = vadd.s32 %v149, %v184
      %v186 = vshrl.u32 %v185, 16
      %v187 = vxor.u32 %v185, %v186
      %v188 = vmul.u32 %v187, 2146121005
      %v189 = vshrl.u32 %v188, 15
      %v190 = vxor.u32 %v188, %v189
      %v191 = vmul.u32 %v190, 2221713035
      %v192 = vshrl.u32 %v191, 16
      %v193 = vxor.u32 %v191, %v192
      %v194 = vshrl.u32 %v193, 8
      %v195 = vcvt.s32.f32 %v194
      %v196 = vmul.f32 %v195, 3.0517578e-05
      %v197 = vcvt.f32.s32.to.zero.pseudo %v196
      %v198 = vadd.s32 %v147, %v197
      %v199 = vcvt.s32.f32 %v198
      %v200 = vmul.f32 %v199, 0.001953125
      %v201 = vfloor.f32 %v200
      %v202 = vcvt.f32.s32.to.zero.pseudo %v201
      %v203 = vmul.u32 %v202, 512
      %v204 = vsub.s32 %v198, %v203
      %v205 = vcvt.s32.f32 %v204
      %v206 = vmul.f32 %v205, 0.001953125
      %v207 = vfloor.f32 %v206
      %v208 = vcvt.f32.s32.to.zero.pseudo %v207
      %v209 = vadd.s32 %v202, %v208
      %v210 = vmul.u32 %v208, 512
      %v211 = vsub.s32 %v204, %v210
      %vm212 = vcmp.ge.s32.totalorder %v211, 512
      %v213 = vsel %vm212, 1, 0
      %v214 = vadd.s32 %v209, %v213
      %vm215 = vcmp.lt.s32.totalorder %v211, 0
      %v216 = vsel %vm215, 1, 0
      %v217 = vsub.s32 %v214, %v216
      %v218 = vmul.u32 %v183, %v183
      %v219 = vstv %s43
      %v220 = vadd.s32 %v149, %v219
      %v221 = vshrl.u32 %v220, 16
      %v222 = vxor.u32 %v220, %v221
      %v223 = vmul.u32 %v222, 2146121005
      %v224 = vshrl.u32 %v223, 15
      %v225 = vxor.u32 %v223, %v224
      %v226 = vmul.u32 %v225, 2221713035
      %v227 = vshrl.u32 %v226, 16
      %v228 = vxor.u32 %v226, %v227
      %v229 = vand.u32 %v228, 1023
      %v230 = vshra.s32 %v218, 10
      %v231 = vand.u32 %v218, 1023
      %vm232 = vcmp.lt.s32.totalorder %v229, %v231
      %v233 = vsel %vm232, 1, 0
      %v234 = vadd.s32 %v230, %v233
      %v235 = vsub.s32 %v217, %v234
      %vm236 = vcmp.gt.s32.totalorder %v235, 0
      %v237 = vsel %vm236, %v235, 0
      %v238 = vadd.s32 %v237, 1
      %vm239 = vcmp.ge.s32.totalorder %v238, 1073741824
      %v240 = vsub.s32 %v238, 1073741824
      %v241 = vsel %vm239, %v240, %v238
      %v242 = vsel %vm239, 1073741824, 0
      %v243 = vadd.s32 %v242, 268435456
      %vm244 = vcmp.le.s32.totalorder %v243, %v241
      %v245 = vsub.s32 %v241, %v242
      %v246 = vsub.s32 %v245, 268435456
      %v247 = vsel %vm244, %v246, %v241
      %v248 = vshra.s32 %v242, 1
      %v249 = vsel %vm244, 268435456, 0
      %v250 = vadd.s32 %v248, %v249
      %v251 = vadd.s32 %v250, 67108864
      %vm252 = vcmp.le.s32.totalorder %v251, %v247
      %v253 = vsub.s32 %v247, %v250
      %v254 = vsub.s32 %v253, 67108864
      %v255 = vsel %vm252, %v254, %v247
      %v256 = vshra.s32 %v250, 1
      %v257 = vsel %vm252, 67108864, 0
      %v258 = vadd.s32 %v256, %v257
      %v259 = vadd.s32 %v258, 16777216
      %vm260 = vcmp.le.s32.totalorder %v259, %v255
      %v261 = vsub.s32 %v255, %v258
      %v262 = vsub.s32 %v261, 16777216
      %v263 = vsel %vm260, %v262, %v255
      %v264 = vshra.s32 %v258, 1
      %v265 = vsel %vm260, 16777216, 0
      %v266 = vadd.s32 %v264, %v265
      %v267 = vadd.s32 %v266, 4194304
      %vm268 = vcmp.le.s32.totalorder %v267, %v263
      %v269 = vsub.s32 %v263, %v266
      %v270 = vsub.s32 %v269, 4194304
      %v271 = vsel %vm268, %v270, %v263
      %v272 = vshra.s32 %v266, 1
      %v273 = vsel %vm268, 4194304, 0
      %v274 = vadd.s32 %v272, %v273
      %v275 = vadd.s32 %v274, 1048576
      %vm276 = vcmp.le.s32.totalorder %v275, %v271
      %v277 = vsub.s32 %v271, %v274
      %v278 = vsub.s32 %v277, 1048576
      %v279 = vsel %vm276, %v278, %v271
      %v280 = vshra.s32 %v274, 1
      %v281 = vsel %vm276, 1048576, 0
      %v282 = vadd.s32 %v280, %v281
      %v283 = vadd.s32 %v282, 262144
      %vm284 = vcmp.le.s32.totalorder %v283, %v279
      %v285 = vsub.s32 %v279, %v282
      %v286 = vsub.s32 %v285, 262144
      %v287 = vsel %vm284, %v286, %v279
      %v288 = vshra.s32 %v282, 1
      %v289 = vsel %vm284, 262144, 0
      %v290 = vadd.s32 %v288, %v289
      %v291 = vadd.s32 %v290, 65536
      %vm292 = vcmp.le.s32.totalorder %v291, %v287
      %v293 = vsub.s32 %v287, %v290
      %v294 = vsub.s32 %v293, 65536
      %v295 = vsel %vm292, %v294, %v287
      %v296 = vshra.s32 %v290, 1
      %v297 = vsel %vm292, 65536, 0
      %v298 = vadd.s32 %v296, %v297
      %v299 = vadd.s32 %v298, 16384
      %vm300 = vcmp.le.s32.totalorder %v299, %v295
      %v301 = vsub.s32 %v295, %v298
      %v302 = vsub.s32 %v301, 16384
      %v303 = vsel %vm300, %v302, %v295
      %v304 = vshra.s32 %v298, 1
      %v305 = vsel %vm300, 16384, 0
      %v306 = vadd.s32 %v304, %v305
      %v307 = vadd.s32 %v306, 4096
      %vm308 = vcmp.le.s32.totalorder %v307, %v303
      %v309 = vsub.s32 %v303, %v306
      %v310 = vsub.s32 %v309, 4096
      %v311 = vsel %vm308, %v310, %v303
      %v312 = vshra.s32 %v306, 1
      %v313 = vsel %vm308, 4096, 0
      %v314 = vadd.s32 %v312, %v313
      %v315 = vadd.s32 %v314, 1024
      %vm316 = vcmp.le.s32.totalorder %v315, %v311
      %v317 = vsub.s32 %v311, %v314
      %v318 = vsub.s32 %v317, 1024
      %v319 = vsel %vm316, %v318, %v311
      %v320 = vshra.s32 %v314, 1
      %v321 = vsel %vm316, 1024, 0
      %v322 = vadd.s32 %v320, %v321
      %v323 = vadd.s32 %v322, 256
      %vm324 = vcmp.le.s32.totalorder %v323, %v319
      %v325 = vsub.s32 %v319, %v322
      %v326 = vsub.s32 %v325, 256
      %v327 = vsel %vm324, %v326, %v319
      %v328 = vshra.s32 %v322, 1
      %v329 = vsel %vm324, 256, 0
      %v330 = vadd.s32 %v328, %v329
      %v331 = vadd.s32 %v330, 64
      %vm332 = vcmp.le.s32.totalorder %v331, %v327
      %v333 = vsub.s32 %v327, %v330
      %v334 = vsub.s32 %v333, 64
      %v335 = vsel %vm332, %v334, %v327
      %v336 = vshra.s32 %v330, 1
      %v337 = vsel %vm332, 64, 0
      %v338 = vadd.s32 %v336, %v337
      %v339 = vadd.s32 %v338, 16
      %vm340 = vcmp.le.s32.totalorder %v339, %v335
      %v341 = vsub.s32 %v335, %v338
      %v342 = vsub.s32 %v341, 16
      %v343 = vsel %vm340, %v342, %v335
      %v344 = vshra.s32 %v338, 1
      %v345 = vsel %vm340, 16, 0
      %v346 = vadd.s32 %v344, %v345
      %v347 = vadd.s32 %v346, 4
      %vm348 = vcmp.le.s32.totalorder %v347, %v343
      %v349 = vsub.s32 %v343, %v346
      %v350 = vsub.s32 %v349, 4
      %v351 = vsel %vm348, %v350, %v343
      %v352 = vshra.s32 %v346, 1
      %v353 = vsel %vm348, 4, 0
      %v354 = vadd.s32 %v352, %v353
      %v355 = vadd.s32 %v354, 1
      %vm356 = vcmp.le.s32.totalorder %v355, %v351
      %v357 = vshra.s32 %v354, 1
      %v358 = vsel %vm356, 1, 0
      %v359 = vadd.s32 %v357, %v358
      %v360 = vmul.u32 %v359, 32
      %vm361 = vcmask 3072
      %362 = vst.msk [vmem:[%s3] sm:$0xf] %vm361, %v183
      %363 = vst.msk [vmem:[%s4] sm:$0xf] %vm361, %v360
      %v364 = vld [vmem:[%s2] sm:$0xf]
      %v365 = vmul.u32 %v364, 896
      %v366 = vmul.u32 %v183, 128
      %v367 = vadd.s32 %v365, %v366
      %v368 = vstv %s44
      %v369 = vadd.s32 %v149, %v368
      %v370 = vshrl.u32 %v369, 16
      %v371 = vxor.u32 %v369, %v370
      %v372 = vmul.u32 %v371, 2146121005
      %v373 = vshrl.u32 %v372, 15
      %v374 = vxor.u32 %v372, %v373
      %v375 = vmul.u32 %v374, 2221713035
      %v376 = vshrl.u32 %v375, 16
      %v377 = vxor.u32 %v375, %v376
      %v378 = vand.u32 %v377, 1023
      %v379 = vshra.s32 %v367, 10
      %v380 = vand.u32 %v367, 1023
      %vm381 = vcmp.lt.s32.totalorder %v378, %v380
      %v382 = vsel %vm381, 1, 0
      %v383 = vadd.s32 %v379, %v382
      %384 = vst.msk [vmem:[%s5] sm:$0xf] %vm361, %v383
      %v385 = vmul.u32 %v360, 128
      %386 = vrot.lane.b32.xlu0 %v385, 1
      %v387 = vpop.permute.xlu0 %386
      %v388 = vadd.s32 %v365, %v387
      %v389 = vstv %s45
      %v390 = vadd.s32 %v149, %v389
      %v391 = vshrl.u32 %v390, 16
      %v392 = vxor.u32 %v390, %v391
      %v393 = vmul.u32 %v392, 2146121005
      %v394 = vshrl.u32 %v393, 15
      %v395 = vxor.u32 %v393, %v394
      %v396 = vmul.u32 %v395, 2221713035
      %v397 = vshrl.u32 %v396, 16
      %v398 = vxor.u32 %v396, %v397
      %v399 = vand.u32 %v398, 1023
      %v400 = vshra.s32 %v388, 10
      %v401 = vand.u32 %v388, 1023
      %402 = vrot.lane.b32.xlu0 %v401, 127
      %v403 = vpop.permute.xlu0 %402
      %vm404 = vcmp.lt.s32.totalorder %v399, %v403
      %v405 = vsel %vm404, 1, 0
      %406 = vrot.lane.b32.xlu0 %v405, 1
      %v407 = vpop.permute.xlu0 %406
      %v408 = vadd.s32 %v400, %v407
      %409 = vrot.lane.b32.xlu0 %v408, 127
      %v410 = vpop.permute.xlu0 %409
      %411 = vst.msk [vmem:[%s6] sm:$0xf] %vm361, %v410
    $region28: #{tpu_custom_call.1} parent=1 // pred_fallthru
      _
    // Predicated region
    $region29: #{tpu_custom_call.1} parent=1 // pred_check
      _
    $region30: #{tpu_custom_call.1} parent=1 // pred_check_branch
      %413 = sbr.rel (0) target = $region32
    $region31: #{tpu_custom_call.1} parent=1 // pred_region
      _
    $region32: #{tpu_custom_call.1} parent=1 // pred_fallthru
      _
    // Predicated region
    $region33: #{tpu_custom_call.1} parent=1 // pred_check
      _
    $region34: #{tpu_custom_call.1} parent=1 // pred_check_branch
      %415 = sbr.rel (0) target = $region36
    $region35: #{tpu_custom_call.1} parent=1 // pred_region
      _
    $region36: #{tpu_custom_call.1} parent=1 // pred_fallthru
      _
    // Predicated region
    $region37: #{tpu_custom_call.1} parent=1 // pred_check
      _
    $region38: #{tpu_custom_call.1} parent=1 // pred_check_branch
      %417 = sbr.rel (0) target = $region40
    $region39: #{tpu_custom_call.1} parent=1 // pred_region
      _
    $region40: #{tpu_custom_call.1} parent=1 // pred_fallthru
      _
    // Predicated region
    $region41: #{tpu_custom_call.1} parent=1 // pred_check
      _
    $region42: #{tpu_custom_call.1} parent=1 // pred_check_branch
      %419 = sbr.rel (0) target = $region44
    $region43: #{tpu_custom_call.1} parent=1 // pred_region
      _
    $region44: #{tpu_custom_call.1} parent=1 // pred_fallthru
      _
    // Predicated region
    $region45: #{tpu_custom_call.1} parent=1 // pred_check
      _
    $region46: #{tpu_custom_call.1} parent=1 // pred_check_branch
      %421 = sbr.rel (0) target = $region48
    $region47: #{tpu_custom_call.1} parent=1 // pred_region
      _
    $region48: #{tpu_custom_call.1} parent=1 // pred_fallthru
      _
    // Predicated region
    $region49: #{tpu_custom_call.1} parent=1 // pred_check
      _
    $region50: #{tpu_custom_call.1} parent=1 // pred_check_branch
      %423 = sbr.rel (0) target = $region52
    $region51: #{tpu_custom_call.1} parent=1 // pred_region
      _
    $region52: #{tpu_custom_call.1} parent=1 // pred_fallthru
      _
    // Predicated region
    $region53: #{tpu_custom_call.1} parent=1 // pred_check
      _
    $region54: #{tpu_custom_call.1} parent=1 // pred_check_branch
      %425 = sbr.rel (0) target = $region56
    $region55: #{tpu_custom_call.1} parent=1 // pred_region
      _
    $region56: #{tpu_custom_call.1} parent=1 // pred_fallthru
      _
    // Predicated region
    $region57: #{tpu_custom_call.1} parent=1 // pred_check
      _
    $region58: #{tpu_custom_call.1} parent=1 // pred_check_branch
      %427 = sbr.rel (0) target = $region60
    $region59: #{tpu_custom_call.1} parent=1 // pred_region
      _
    $region60: #{tpu_custom_call.1} parent=1 // pred_fallthru
      _
    %428 = vsyncpa [#allocation7], 1

</llo_original>
